<compile_context>
chip_gen: v5e
topology: v5e:2x2
jax: 0.10.0
libtpu: 0.0.40
codegen_flags: <defaults>
</compile_context>

<pallas_src>
import functools

import jax
import jax.numpy as jnp
from jax.experimental import pallas as pl
from jax.experimental.pallas import tpu as pltpu

EPS = 1e-5


def _tc_resblock_stack_kernel(x_ref, c_ref, mask_ref, temb_ref,
                              w1_ref, b1_ref, g_ref, be_ref,
                              w2_ref, b2_ref, w3_ref, b3_ref, ls_ref,
                              o_ref, *, L, K, pad_left, eps, use_bf16):
    """Fused stack of L TCResidualBlocks for one batch element (BCT layout).

    x_ref:    (1, C, T)      activation slab (stays in VMEM across all layers)
    c_ref:    (1, Dc, T)     condition (concat-conditioning branch)
    mask_ref: (1, 1, T)      TensorMask time mask (applied once, at the end)
    temb_ref: (L, 1, C, 1)   per-layer time embedding time_emb(act(t))[..., None]
    w1_ref:   (L, K, C, 1)   depthwise conv1 weights (groups == C)
    b1/g/be/b3/ls: (L, C, 1) ; w2: (L, Hc, C+Dc) ; b2: (L, Hc, 1) ; w3: (L, C, Hc)
    """
    C, T = x_ref.shape[1], x_ref.shape[2]
    state = x_ref[0]                                   # (C, T) f32, VMEM-resident
    cond = c_ref[0]                                    # (Dc, T)
    cond_mm = cond.astype(jnp.bfloat16) if use_bf16 else cond

    # Depthwise-conv edge masks are layer independent -> hoist out of the loop.
    t_idx = jax.lax.broadcasted_iota(jnp.int32, (C, T), 1)
    edge = {}
    for k in range(K):
        off = k - pad_left
        if off < 0:
            edge[off] = t_idx >= -off
        elif off > 0:
            edge[off] = t_idx < T - off

    for l in range(L):
        # ---- depthwise Conv1d (kernel_size=K, "same" zero padding) ----
        h = jnp.zeros((C, T), jnp.float32)
        for k in range(K):
            off = k - pad_left
            if off == 0:
                xs = state
            else:
                shift = (-off) if off < 0 else (T - off)   # xs[:, t] = state[:, t+off]
                xs = jnp.where(edge[off], pltpu.roll(state, shift=shift, axis=1), 0.0)
            h = h + w1_ref[l, k] * xs                      # (C,1) * (C,T)
        # conv1 bias + time embedding  (conv1(x) + t)
        h = h + b1_ref[l] + temb_ref[l, 0]

        # ---- GroupNorm(num_groups=1): stats over the whole (C, T) slab ----
        mean = jnp.mean(h, keepdims=True)
        var = jnp.mean(jnp.square(h - mean), keepdims=True)
        hn = (h - mean) * jax.lax.rsqrt(var + eps)
        hn = g_ref[l] * hn + be_ref[l]

        # ---- concat conditioning + conv2 (1x1) + ReLU ----
        if use_bf16:                    # bf16 MXU inputs, f32 accumulation (v6e/v7x)
            hn_mm = hn.astype(jnp.bfloat16)
            w2 = w2_ref[l].astype(jnp.bfloat16)
        else:
            hn_mm = hn
            w2 = w2_ref[l]
        hcat = jnp.concatenate([hn_mm, cond_mm], axis=0)   # (C+Dc, T)
        h2 = jnp.dot(w2, hcat, preferred_element_type=jnp.float32) + b2_ref[l]
        h2 = jnp.maximum(h2, 0.0)

        # ---- conv3 (1x1); dropout p=0 -> identity ----
        if use_bf16:
            h2 = h2.astype(jnp.bfloat16)
            w3 = w3_ref[l].astype(jnp.bfloat16)
        else:
            w3 = w3_ref[l]
        h3 = jnp.dot(w3, h2, preferred_element_type=jnp.float32) + b3_ref[l]

        # ---- layer_scale * h + shortcut (Identity) ----
        state = ls_ref[l] * h3 + state

    # Final TensorMask apply folded into the kernel (lane-dense full-width store).
    o_ref[0] = (state * mask_ref[0]).astype(o_ref.dtype)


def tc_resblock_stack(x_bct, c_bct, t, mask_bt, layer_params, *, K=3, eps=EPS,
                      use_bf16=False):
    """Forward through a stack of TCResidualBlocks sharing (c, t). x is BCT."""
    B, C, T = x_bct.shape
    Dc = c_bct.shape[1]
    L = len(layer_params)
    Hc = layer_params[0]["w2"].shape[0]
    pad_left = (K - 1) // 2

    # time_emb(act(t)) per layer -- tiny (B, time_dim) matvec, done in plain JAX.
    t_act = jnp.maximum(t, 0.0)
    temb = jnp.stack([t_act @ p["wt"].T + p["bt"] for p in layer_params], axis=0)
    temb = temb[:, :, :, None].astype(jnp.float32)             # (L, B, C, 1)

    stk = lambda name: jnp.stack([p[name] for p in layer_params], axis=0)
    w1, b1 = stk("w1"), stk("b1")
    gamma, beta = stk("gamma"), stk("beta")
    w2, b2, w3, b3, ls = stk("w2"), stk("b2"), stk("w3"), stk("b3"), stk("ls")
    mask_f = mask_bt.astype(jnp.float32)[:, None, :]           # (B, 1, T)

    kernel = functools.partial(_tc_resblock_stack_kernel, L=L, K=K,
                               pad_left=pad_left, eps=eps, use_bf16=use_bf16)

    flops_per_bl = (2 * K * C * T + 10 * C * T
                    + 2 * Hc * (C + Dc) * T + Hc * T
                    + 2 * C * Hc * T + 2 * C * T)
    inputs = (x_bct, c_bct, mask_f, temb, w1, b1, gamma, beta, w2, b2, w3, b3, ls)
    bytes_accessed = sum(int(a.size) * 4 for a in inputs) + B * C * T * 4
    cost = pl.CostEstimate(flops=int(B * L * flops_per_bl),
                           transcendentals=int(B * L),
                           bytes_accessed=int(bytes_accessed))

    return pl.pallas_call(
        kernel,
        out_shape=jax.ShapeDtypeStruct((B, C, T), jnp.float32),
        grid=(B,),
        in_specs=[
            pl.BlockSpec((1, C, T), lambda b: (b, 0, 0)),        # x
            pl.BlockSpec((1, Dc, T), lambda b: (b, 0, 0)),       # c
            pl.BlockSpec((1, 1, T), lambda b: (b, 0, 0)),        # mask
            pl.BlockSpec((L, 1, C, 1), lambda b: (0, b, 0, 0)),  # time embeddings
            pl.BlockSpec((L, K, C, 1), lambda b: (0, 0, 0, 0)),  # w1 (depthwise)
            pl.BlockSpec((L, C, 1), lambda b: (0, 0, 0)),        # b1
            pl.BlockSpec((L, C, 1), lambda b: (0, 0, 0)),        # gamma
            pl.BlockSpec((L, C, 1), lambda b: (0, 0, 0)),        # beta
            pl.BlockSpec((L, Hc, C + Dc), lambda b: (0, 0, 0)),  # w2
            pl.BlockSpec((L, Hc, 1), lambda b: (0, 0, 0)),       # b2
            pl.BlockSpec((L, C, Hc), lambda b: (0, 0, 0)),       # w3
            pl.BlockSpec((L, C, 1), lambda b: (0, 0, 0)),        # b3
            pl.BlockSpec((L, C, 1), lambda b: (0, 0, 0)),        # layer_scale gamma
        ],
        out_specs=pl.BlockSpec((1, C, T), lambda b: (b, 0, 0)),
        compiler_params=pltpu.CompilerParams(dimension_semantics=("parallel",)),
        cost_estimate=cost,
        # NOTE: resident set here is tiny; for production C/Hc/T sizes set
        # vmem_limit_bytes (v7x has 64 MiB physical / 32 MiB scoped default) or
        # tile T with a two-pass GroupNorm.
    )(*inputs)


# ---------------- reference (plain JAX) for correctness check ----------------
def ref_forward(x_bct, c_bct, t, mask_bt, layer_params, K=3, eps=EPS):
    B, C, T = x_bct.shape
    pad_left = (K - 1) // 2
    state = x_bct
    t_act = jnp.maximum(t, 0.0)
    for p in layer_params:
        temb = t_act @ p["wt"].T + p["bt"]                       # (B, C)
        xp = jnp.pad(state, ((0, 0), (0, 0), (pad_left, K - 1 - pad_left)))
        h = jnp.zeros_like(state)
        for k in range(K):
            h = h + p["w1"][k][None] * xp[:, :, k:k + T]
        h = h + p["b1"][None] + temb[:, :, None]
        mean = jnp.mean(h, axis=(1, 2), keepdims=True)
        var = jnp.mean((h - mean) ** 2, axis=(1, 2), keepdims=True)
        hn = (h - mean) / jnp.sqrt(var + eps)
        hn = p["gamma"][None] * hn + p["beta"][None]
        hcat = jnp.concatenate([hn, c_bct], axis=1)              # (B, C+Dc, T)
        h2 = jnp.einsum("hc,bct->bht", p["w2"], hcat) + p["b2"][None]
        h2 = jnp.maximum(h2, 0.0)
        h3 = jnp.einsum("ch,bht->bct", p["w3"], h2) + p["b3"][None]
        state = p["ls"][None] * h3 + state
    return state * mask_bt.astype(jnp.float32)[:, None, :]


def init_layer_params(key, C, Dc, Hc, Td, K):
    ks = jax.random.split(key, 10)
    return dict(
        w1=jax.random.normal(ks[0], (K, C, 1), jnp.float32) * 0.3,
        b1=jax.random.normal(ks[1], (C, 1), jnp.float32) * 0.1,
        gamma=1.0 + 0.1 * jax.random.normal(ks[2], (C, 1), jnp.float32),
        beta=0.1 * jax.random.normal(ks[3], (C, 1), jnp.float32),
        w2=jax.random.normal(ks[4], (Hc, C + Dc), jnp.float32) / (C + Dc) ** 0.5,
        b2=jax.random.normal(ks[5], (Hc, 1), jnp.float32) * 0.1,
        w3=jax.random.normal(ks[6], (C, Hc), jnp.float32) / Hc ** 0.5,
        b3=jax.random.normal(ks[7], (C, 1), jnp.float32) * 0.1,
        # LayerScale gamma (PyTorch init is eps*ones; here "trained" values so the
        # op is actually exercised by the check).
        ls=jax.random.uniform(ks[8], (C, 1), jnp.float32, minval=0.5, maxval=1.5),
        # time_emb = nn.Linear(time_dim, C)
        wt=jax.random.normal(ks[9], (C, Td), jnp.float32) / Td ** 0.5,
        bt=jnp.zeros((C,), jnp.float32) + 0.05,
    )


if __name__ == "__main__":
    key = jax.random.PRNGKey(0)
    # Small but lane-dense shapes: time axis = 128 (lane width) for dense stores.
    B, T, C, Dc, Hc, Td, K, L = 2, 128, 8, 8, 32, 16, 3, 2

    kx, kc, kt, *klayers = jax.random.split(key, L + 3)
    x_bct = jax.random.normal(kx, (B, C, T), jnp.float32)     # BCT (module layout)
    c_bct = jax.random.normal(kc, (B, Dc, T), jnp.float32)    # condition, BCT
    t_vec = jax.random.normal(kt, (B, Td), jnp.float32)       # diffusion time embedding
    lengths = jnp.array([128, 100], jnp.int32)                # TensorMask lengths
    mask_bt = jnp.arange(T)[None, :] < lengths[:, None]

    params = [init_layer_params(k, C, Dc, Hc, Td, K) for k in klayers]

    # f32 path (all generations)
    out = tc_resblock_stack(x_bct, c_bct, t_vec, mask_bt, params, K=K)
    out = jax.block_until_ready(out)
    ref = ref_forward(x_bct, c_bct, t_vec, mask_bt, params, K=K)
    assert out.shape == (B, C, T)
    err = float(jnp.max(jnp.abs(out - ref)))
    assert jnp.allclose(out, ref, rtol=2e-4, atol=2e-4), err

    # bf16 MXU path for the 1x1-conv matmuls (v6e/v7x perf feedback), f32 accumulate.
    out_bf16 = tc_resblock_stack(x_bct, c_bct, t_vec, mask_bt, params, K=K,
                                 use_bf16=True)
    out_bf16 = jax.block_until_ready(out_bf16)
    assert jnp.allclose(out_bf16, ref, rtol=1e-1, atol=1e-1), \
        float(jnp.max(jnp.abs(out_bf16 - ref)))

    print("KERNEL_OK")
</pallas_src>

<mosaic_0001>
module attributes {stable_mosaic.version = 11 : i64} {
  func.func @_tc_resblock_stack_kernel(%arg0: i32, %arg1: memref<1x8x128xf32, #tpu.memory_space<vmem>>, %arg2: memref<1x8x128xf32, #tpu.memory_space<vmem>>, %arg3: memref<1x1x128xf32, #tpu.memory_space<vmem>>, %arg4: memref<2x1x8x1xf32, #tpu.memory_space<vmem>>, %arg5: memref<2x3x8x1xf32, #tpu.memory_space<vmem>>, %arg6: memref<2x8x1xf32, #tpu.memory_space<vmem>>, %arg7: memref<2x8x1xf32, #tpu.memory_space<vmem>>, %arg8: memref<2x8x1xf32, #tpu.memory_space<vmem>>, %arg9: memref<2x32x16xf32, #tpu.memory_space<vmem>>, %arg10: memref<2x32x1xf32, #tpu.memory_space<vmem>>, %arg11: memref<2x8x32xf32, #tpu.memory_space<vmem>>, %arg12: memref<2x8x1xf32, #tpu.memory_space<vmem>>, %arg13: memref<2x8x1xf32, #tpu.memory_space<vmem>>, %arg14: memref<1x8x128xf32, #tpu.memory_space<vmem>>) attributes {dimension_semantics = [#tpu.dimension_semantics<parallel>], iteration_bounds = array<i64: 2>, scalar_prefetch = 0 : i64, scratch_operands = 0 : i64, tpu.core_type = #tpu.core_type<tc>, window_params = [{transform_indices = @transform_0, window_bounds = array<i64: 1, 8, 128>}, {transform_indices = @transform_1, window_bounds = array<i64: 1, 8, 128>}, {transform_indices = @transform_2, window_bounds = array<i64: 1, 1, 128>}, {transform_indices = @transform_3, window_bounds = array<i64: 2, 1, 8, 1>}, {pipeline_mode = #tpu.pipeline_mode<synchronous>, transform_indices = @transform_4, window_bounds = array<i64: 2, 3, 8, 1>}, {pipeline_mode = #tpu.pipeline_mode<synchronous>, transform_indices = @transform_5, window_bounds = array<i64: 2, 8, 1>}, {pipeline_mode = #tpu.pipeline_mode<synchronous>, transform_indices = @transform_6, window_bounds = array<i64: 2, 8, 1>}, {pipeline_mode = #tpu.pipeline_mode<synchronous>, transform_indices = @transform_7, window_bounds = array<i64: 2, 8, 1>}, {pipeline_mode = #tpu.pipeline_mode<synchronous>, transform_indices = @transform_8, window_bounds = array<i64: 2, 32, 16>}, {pipeline_mode = #tpu.pipeline_mode<synchronous>, transform_indices = @transform_9, window_bounds = array<i64: 2, 32, 1>}, {pipeline_mode = #tpu.pipeline_mode<synchronous>, transform_indices = @transform_10, window_bounds = array<i64: 2, 8, 32>}, {pipeline_mode = #tpu.pipeline_mode<synchronous>, transform_indices = @transform_11, window_bounds = array<i64: 2, 8, 1>}, {pipeline_mode = #tpu.pipeline_mode<synchronous>, transform_indices = @transform_12, window_bounds = array<i64: 2, 8, 1>}, {transform_indices = @transform_13, window_bounds = array<i64: 1, 8, 128>}]} {
    %c0 = arith.constant 0 : index
    %c0_0 = arith.constant 0 : index
    %c0_1 = arith.constant 0 : index
    %0 = vector.load %arg1[%c0, %c0_0, %c0_1] : memref<1x8x128xf32, #tpu.memory_space<vmem>>, vector<1x8x128xf32>
    %1 = vector.shape_cast %0 : vector<1x8x128xf32> to vector<8x128xf32>
    %c0_2 = arith.constant 0 : index
    %c0_3 = arith.constant 0 : index
    %c0_4 = arith.constant 0 : index
    %2 = vector.load %arg2[%c0_2, %c0_3, %c0_4] : memref<1x8x128xf32, #tpu.memory_space<vmem>>, vector<1x8x128xf32>
    %3 = vector.shape_cast %2 : vector<1x8x128xf32> to vector<8x128xf32>
    %4 = tpu.iota {dimensions = array<i32: 1>} : vector<8x128xi32>
    %c1_i32 = arith.constant 1 : i32
    %5 = vector.broadcast %c1_i32 : i32 to vector<8x128xi32>
    %6 = arith.cmpi sge, %4, %5 : vector<8x128xi32>
    %c127_i32 = arith.constant 127 : i32
    %7 = vector.broadcast %c127_i32 : i32 to vector<8x128xi32>
    %8 = arith.cmpi slt, %4, %7 : vector<8x128xi32>
    %cst = arith.constant 0.000000e+00 : f32
    %9 = vector.broadcast %cst : f32 to vector<8x128xf32>
    %c1_i32_5 = arith.constant 1 : i32
    %10 = tpu.dynamic_rotate %1 by %c1_i32_5 dim 1 : vector<8x128xf32>, i32 -> vector<8x128xf32>
    %cst_6 = arith.constant 0.000000e+00 : f32
    %11 = vector.broadcast %cst_6 : f32 to vector<8x128xf32>
    %12 = arith.select %6, %10, %11 : vector<8x128xi1>, vector<8x128xf32>
    %c0_7 = arith.constant 0 : index
    %c0_8 = arith.constant 0 : index
    %c0_9 = arith.constant 0 : index
    %c0_10 = arith.constant 0 : index
    %13 = vector.load %arg5[%c0_7, %c0_8, %c0_9, %c0_10] : memref<2x3x8x1xf32, #tpu.memory_space<vmem>>, vector<1x1x8x1xf32>
    %14 = vector.shape_cast %13 : vector<1x1x8x1xf32> to vector<8x1xf32>
    %15 = vector.broadcast %14 : vector<8x1xf32> to vector<8x128xf32>
    %16 = arith.mulf %15, %12 : vector<8x128xf32>
    %17 = arith.addf %9, %16 : vector<8x128xf32>
    %c0_11 = arith.constant 0 : index
    %c1 = arith.constant 1 : index
    %c0_12 = arith.constant 0 : index
    %c0_13 = arith.constant 0 : index
    %18 = vector.load %arg5[%c0_11, %c1, %c0_12, %c0_13] : memref<2x3x8x1xf32, #tpu.memory_space<vmem>>, vector<1x1x8x1xf32>
    %19 = vector.shape_cast %18 : vector<1x1x8x1xf32> to vector<8x1xf32>
    %20 = vector.broadcast %19 : vector<8x1xf32> to vector<8x128xf32>
    %21 = arith.mulf %20, %1 : vector<8x128xf32>
    %22 = arith.addf %17, %21 : vector<8x128xf32>
    %c127_i32_14 = arith.constant 127 : i32
    %23 = tpu.dynamic_rotate %1 by %c127_i32_14 dim 1 : vector<8x128xf32>, i32 -> vector<8x128xf32>
    %cst_15 = arith.constant 0.000000e+00 : f32
    %24 = vector.broadcast %cst_15 : f32 to vector<8x128xf32>
    %25 = arith.select %8, %23, %24 : vector<8x128xi1>, vector<8x128xf32>
    %c0_16 = arith.constant 0 : index
    %c2 = arith.constant 2 : index
    %c0_17 = arith.constant 0 : index
    %c0_18 = arith.constant 0 : index
    %26 = vector.load %arg5[%c0_16, %c2, %c0_17, %c0_18] : memref<2x3x8x1xf32, #tpu.memory_space<vmem>>, vector<1x1x8x1xf32>
    %27 = vector.shape_cast %26 : vector<1x1x8x1xf32> to vector<8x1xf32>
    %28 = vector.broadcast %27 : vector<8x1xf32> to vector<8x128xf32>
    %29 = arith.mulf %28, %25 : vector<8x128xf32>
    %30 = arith.addf %22, %29 : vector<8x128xf32>
    %c0_19 = arith.constant 0 : index
    %c0_20 = arith.constant 0 : index
    %c0_21 = arith.constant 0 : index
    %31 = vector.load %arg6[%c0_19, %c0_20, %c0_21] : memref<2x8x1xf32, #tpu.memory_space<vmem>>, vector<1x8x1xf32>
    %32 = vector.shape_cast %31 : vector<1x8x1xf32> to vector<8x1xf32>
    %33 = vector.broadcast %32 : vector<8x1xf32> to vector<8x128xf32>
    %34 = arith.addf %30, %33 : vector<8x128xf32>
    %c0_22 = arith.constant 0 : index
    %c0_23 = arith.constant 0 : index
    %c0_24 = arith.constant 0 : index
    %c0_25 = arith.constant 0 : index
    %35 = vector.load %arg4[%c0_22, %c0_23, %c0_24, %c0_25] : memref<2x1x8x1xf32, #tpu.memory_space<vmem>>, vector<1x1x8x1xf32>
    %36 = vector.shape_cast %35 : vector<1x1x8x1xf32> to vector<8x1xf32>
    %37 = vector.broadcast %36 : vector<8x1xf32> to vector<8x128xf32>
    %38 = arith.addf %34, %37 : vector<8x128xf32>
    %39 = vector.shape_cast %38 : vector<8x128xf32> to vector<1x8x128xf32>
    %cst_26 = arith.constant dense<0.000000e+00> : vector<1xf32>
    %40 = vector.multi_reduction <add>, %39, %cst_26 [1, 2] : vector<1x8x128xf32> to vector<1xf32>
    %41 = vector.shape_cast %40 : vector<1xf32> to vector<1x1x1xf32>
    %42 = vector.extract %41[0, 0, 0] : f32 from vector<1x1x1xf32>
    %43 = vector.broadcast %42 : f32 to vector<1x1xf32>
    %cst_27 = arith.constant 1.024000e+03 : f32
    %44 = vector.broadcast %cst_27 : f32 to vector<1x1xf32>
    %45 = arith.divf %43, %44 : vector<1x1xf32>
    %46 = vector.broadcast %45 : vector<1x1xf32> to vector<8x128xf32>
    %47 = arith.subf %38, %46 : vector<8x128xf32>
    %48 = arith.mulf %47, %47 : vector<8x128xf32>
    %49 = vector.shape_cast %48 : vector<8x128xf32> to vector<1x8x128xf32>
    %cst_28 = arith.constant dense<0.000000e+00> : vector<1xf32>
    %50 = vector.multi_reduction <add>, %49, %cst_28 [1, 2] : vector<1x8x128xf32> to vector<1xf32>
    %51 = vector.shape_cast %50 : vector<1xf32> to vector<1x1x1xf32>
    %52 = vector.extract %51[0, 0, 0] : f32 from vector<1x1x1xf32>
    %53 = vector.broadcast %52 : f32 to vector<1x1xf32>
    %cst_29 = arith.constant 1.024000e+03 : f32
    %54 = vector.broadcast %cst_29 : f32 to vector<1x1xf32>
    %55 = arith.divf %53, %54 : vector<1x1xf32>
    %56 = vector.broadcast %45 : vector<1x1xf32> to vector<8x128xf32>
    %57 = arith.subf %38, %56 : vector<8x128xf32>
    %cst_30 = arith.constant 9.99999974E-6 : f32
    %58 = vector.broadcast %cst_30 : f32 to vector<1x1xf32>
    %59 = arith.addf %55, %58 : vector<1x1xf32>
    %60 = math.rsqrt %59 : vector<1x1xf32>
    %61 = vector.broadcast %60 : vector<1x1xf32> to vector<8x128xf32>
    %62 = arith.mulf %57, %61 : vector<8x128xf32>
    %c0_31 = arith.constant 0 : index
    %c0_32 = arith.constant 0 : index
    %c0_33 = arith.constant 0 : index
    %63 = vector.load %arg7[%c0_31, %c0_32, %c0_33] : memref<2x8x1xf32, #tpu.memory_space<vmem>>, vector<1x8x1xf32>
    %64 = vector.shape_cast %63 : vector<1x8x1xf32> to vector<8x1xf32>
    %65 = vector.broadcast %64 : vector<8x1xf32> to vector<8x128xf32>
    %66 = arith.mulf %65, %62 : vector<8x128xf32>
    %c0_34 = arith.constant 0 : index
    %c0_35 = arith.constant 0 : index
    %c0_36 = arith.constant 0 : index
    %67 = vector.load %arg8[%c0_34, %c0_35, %c0_36] : memref<2x8x1xf32, #tpu.memory_space<vmem>>, vector<1x8x1xf32>
    %68 = vector.shape_cast %67 : vector<1x8x1xf32> to vector<8x1xf32>
    %69 = vector.broadcast %68 : vector<8x1xf32> to vector<8x128xf32>
    %70 = arith.addf %66, %69 : vector<8x128xf32>
    %c0_37 = arith.constant 0 : index
    %c0_38 = arith.constant 0 : index
    %c0_39 = arith.constant 0 : index
    %71 = vector.load %arg9[%c0_37, %c0_38, %c0_39] : memref<2x32x16xf32, #tpu.memory_space<vmem>>, vector<1x32x16xf32>
    %72 = vector.shape_cast %71 : vector<1x32x16xf32> to vector<32x16xf32>
    %73 = tpu.concatenate %70, %3 in 0 : vector<8x128xf32>, vector<8x128xf32> -> vector<16x128xf32>
    %cst_40 = arith.constant dense<0.000000e+00> : vector<32x128xf32>
    %74 = tpu.matmul %72, %73, %cst_40 {dimension_numbers = #tpu.dot_dimension_numbers<[1], [0], [0], [1], [0, 0, 1, 1], [], []>} : vector<32x16xf32>, vector<16x128xf32>, vector<32x128xf32> -> vector<32x128xf32>
    %c0_41 = arith.constant 0 : index
    %c0_42 = arith.constant 0 : index
    %c0_43 = arith.constant 0 : index
    %75 = vector.load %arg10[%c0_41, %c0_42, %c0_43] : memref<2x32x1xf32, #tpu.memory_space<vmem>>, vector<1x32x1xf32>
    %76 = vector.shape_cast %75 : vector<1x32x1xf32> to vector<32x1xf32>
    %77 = vector.broadcast %76 : vector<32x1xf32> to vector<32x128xf32>
    %78 = arith.addf %74, %77 : vector<32x128xf32>
    %cst_44 = arith.constant 0.000000e+00 : f32
    %79 = vector.broadcast %cst_44 : f32 to vector<32x128xf32>
    %80 = arith.maximumf %78, %79 : vector<32x128xf32>
    %c0_45 = arith.constant 0 : index
    %c0_46 = arith.constant 0 : index
    %c0_47 = arith.constant 0 : index
    %81 = vector.load %arg11[%c0_45, %c0_46, %c0_47] : memref<2x8x32xf32, #tpu.memory_space<vmem>>, vector<1x8x32xf32>
    %82 = vector.shape_cast %81 : vector<1x8x32xf32> to vector<8x32xf32>
    %cst_48 = arith.constant dense<0.000000e+00> : vector<8x128xf32>
    %83 = tpu.matmul %82, %80, %cst_48 {dimension_numbers = #tpu.dot_dimension_numbers<[1], [0], [0], [1], [0, 0, 1, 1], [], []>} : vector<8x32xf32>, vector<32x128xf32>, vector<8x128xf32> -> vector<8x128xf32>
    %c0_49 = arith.constant 0 : index
    %c0_50 = arith.constant 0 : index
    %c0_51 = arith.constant 0 : index
    %84 = vector.load %arg12[%c0_49, %c0_50, %c0_51] : memref<2x8x1xf32, #tpu.memory_space<vmem>>, vector<1x8x1xf32>
    %85 = vector.shape_cast %84 : vector<1x8x1xf32> to vector<8x1xf32>
    %86 = vector.broadcast %85 : vector<8x1xf32> to vector<8x128xf32>
    %87 = arith.addf %83, %86 : vector<8x128xf32>
    %c0_52 = arith.constant 0 : index
    %c0_53 = arith.constant 0 : index
    %c0_54 = arith.constant 0 : index
    %88 = vector.load %arg13[%c0_52, %c0_53, %c0_54] : memref<2x8x1xf32, #tpu.memory_space<vmem>>, vector<1x8x1xf32>
    %89 = vector.shape_cast %88 : vector<1x8x1xf32> to vector<8x1xf32>
    %90 = vector.broadcast %89 : vector<8x1xf32> to vector<8x128xf32>
    %91 = arith.mulf %90, %87 : vector<8x128xf32>
    %92 = arith.addf %91, %1 : vector<8x128xf32>
    %cst_55 = arith.constant 0.000000e+00 : f32
    %93 = vector.broadcast %cst_55 : f32 to vector<8x128xf32>
    %c1_i32_56 = arith.constant 1 : i32
    %94 = tpu.dynamic_rotate %92 by %c1_i32_56 dim 1 : vector<8x128xf32>, i32 -> vector<8x128xf32>
    %cst_57 = arith.constant 0.000000e+00 : f32
    %95 = vector.broadcast %cst_57 : f32 to vector<8x128xf32>
    %96 = arith.select %6, %94, %95 : vector<8x128xi1>, vector<8x128xf32>
    %c1_58 = arith.constant 1 : index
    %c0_59 = arith.constant 0 : index
    %c0_60 = arith.constant 0 : index
    %c0_61 = arith.constant 0 : index
    %97 = vector.load %arg5[%c1_58, %c0_59, %c0_60, %c0_61] : memref<2x3x8x1xf32, #tpu.memory_space<vmem>>, vector<1x1x8x1xf32>
    %98 = vector.shape_cast %97 : vector<1x1x8x1xf32> to vector<8x1xf32>
    %99 = vector.broadcast %98 : vector<8x1xf32> to vector<8x128xf32>
    %100 = arith.mulf %99, %96 : vector<8x128xf32>
    %101 = arith.addf %93, %100 : vector<8x128xf32>
    %c1_62 = arith.constant 1 : index
    %c1_63 = arith.constant 1 : index
    %c0_64 = arith.constant 0 : index
    %c0_65 = arith.constant 0 : index
    %102 = vector.load %arg5[%c1_62, %c1_63, %c0_64, %c0_65] : memref<2x3x8x1xf32, #tpu.memory_space<vmem>>, vector<1x1x8x1xf32>
    %103 = vector.shape_cast %102 : vector<1x1x8x1xf32> to vector<8x1xf32>
    %104 = vector.broadcast %103 : vector<8x1xf32> to vector<8x128xf32>
    %105 = arith.mulf %104, %92 : vector<8x128xf32>
    %106 = arith.addf %101, %105 : vector<8x128xf32>
    %c127_i32_66 = arith.constant 127 : i32
    %107 = tpu.dynamic_rotate %92 by %c127_i32_66 dim 1 : vector<8x128xf32>, i32 -> vector<8x128xf32>
    %cst_67 = arith.constant 0.000000e+00 : f32
    %108 = vector.broadcast %cst_67 : f32 to vector<8x128xf32>
    %109 = arith.select %8, %107, %108 : vector<8x128xi1>, vector<8x128xf32>
    %c1_68 = arith.constant 1 : index
    %c2_69 = arith.constant 2 : index
    %c0_70 = arith.constant 0 : index
    %c0_71 = arith.constant 0 : index
    %110 = vector.load %arg5[%c1_68, %c2_69, %c0_70, %c0_71] : memref<2x3x8x1xf32, #tpu.memory_space<vmem>>, vector<1x1x8x1xf32>
    %111 = vector.shape_cast %110 : vector<1x1x8x1xf32> to vector<8x1xf32>
    %112 = vector.broadcast %111 : vector<8x1xf32> to vector<8x128xf32>
    %113 = arith.mulf %112, %109 : vector<8x128xf32>
    %114 = arith.addf %106, %113 : vector<8x128xf32>
    %c1_72 = arith.constant 1 : index
    %c0_73 = arith.constant 0 : index
    %c0_74 = arith.constant 0 : index
    %115 = vector.load %arg6[%c1_72, %c0_73, %c0_74] : memref<2x8x1xf32, #tpu.memory_space<vmem>>, vector<1x8x1xf32>
    %116 = vector.shape_cast %115 : vector<1x8x1xf32> to vector<8x1xf32>
    %117 = vector.broadcast %116 : vector<8x1xf32> to vector<8x128xf32>
    %118 = arith.addf %114, %117 : vector<8x128xf32>
    %c1_75 = arith.constant 1 : index
    %c0_76 = arith.constant 0 : index
    %c0_77 = arith.constant 0 : index
    %c0_78 = arith.constant 0 : index
    %119 = vector.load %arg4[%c1_75, %c0_76, %c0_77, %c0_78] : memref<2x1x8x1xf32, #tpu.memory_space<vmem>>, vector<1x1x8x1xf32>
    %120 = vector.shape_cast %119 : vector<1x1x8x1xf32> to vector<8x1xf32>
    %121 = vector.broadcast %120 : vector<8x1xf32> to vector<8x128xf32>
    %122 = arith.addf %118, %121 : vector<8x128xf32>
    %123 = vector.shape_cast %122 : vector<8x128xf32> to vector<1x8x128xf32>
    %cst_79 = arith.constant dense<0.000000e+00> : vector<1xf32>
    %124 = vector.multi_reduction <add>, %123, %cst_79 [1, 2] : vector<1x8x128xf32> to vector<1xf32>
    %125 = vector.shape_cast %124 : vector<1xf32> to vector<1x1x1xf32>
    %126 = vector.extract %125[0, 0, 0] : f32 from vector<1x1x1xf32>
    %127 = vector.broadcast %126 : f32 to vector<1x1xf32>
    %cst_80 = arith.constant 1.024000e+03 : f32
    %128 = vector.broadcast %cst_80 : f32 to vector<1x1xf32>
    %129 = arith.divf %127, %128 : vector<1x1xf32>
    %130 = vector.broadcast %129 : vector<1x1xf32> to vector<8x128xf32>
    %131 = arith.subf %122, %130 : vector<8x128xf32>
    %132 = arith.mulf %131, %131 : vector<8x128xf32>
    %133 = vector.shape_cast %132 : vector<8x128xf32> to vector<1x8x128xf32>
    %cst_81 = arith.constant dense<0.000000e+00> : vector<1xf32>
    %134 = vector.multi_reduction <add>, %133, %cst_81 [1, 2] : vector<1x8x128xf32> to vector<1xf32>
    %135 = vector.shape_cast %134 : vector<1xf32> to vector<1x1x1xf32>
    %136 = vector.extract %135[0, 0, 0] : f32 from vector<1x1x1xf32>
    %137 = vector.broadcast %136 : f32 to vector<1x1xf32>
    %cst_82 = arith.constant 1.024000e+03 : f32
    %138 = vector.broadcast %cst_82 : f32 to vector<1x1xf32>
    %139 = arith.divf %137, %138 : vector<1x1xf32>
    %140 = vector.broadcast %129 : vector<1x1xf32> to vector<8x128xf32>
    %141 = arith.subf %122, %140 : vector<8x128xf32>
    %cst_83 = arith.constant 9.99999974E-6 : f32
    %142 = vector.broadcast %cst_83 : f32 to vector<1x1xf32>
    %143 = arith.addf %139, %142 : vector<1x1xf32>
    %144 = math.rsqrt %143 : vector<1x1xf32>
    %145 = vector.broadcast %144 : vector<1x1xf32> to vector<8x128xf32>
    %146 = arith.mulf %141, %145 : vector<8x128xf32>
    %c1_84 = arith.constant 1 : index
    %c0_85 = arith.constant 0 : index
    %c0_86 = arith.constant 0 : index
    %147 = vector.load %arg7[%c1_84, %c0_85, %c0_86] : memref<2x8x1xf32, #tpu.memory_space<vmem>>, vector<1x8x1xf32>
    %148 = vector.shape_cast %147 : vector<1x8x1xf32> to vector<8x1xf32>
    %149 = vector.broadcast %148 : vector<8x1xf32> to vector<8x128xf32>
    %150 = arith.mulf %149, %146 : vector<8x128xf32>
    %c1_87 = arith.constant 1 : index
    %c0_88 = arith.constant 0 : index
    %c0_89 = arith.constant 0 : index
    %151 = vector.load %arg8[%c1_87, %c0_88, %c0_89] : memref<2x8x1xf32, #tpu.memory_space<vmem>>, vector<1x8x1xf32>
    %152 = vector.shape_cast %151 : vector<1x8x1xf32> to vector<8x1xf32>
    %153 = vector.broadcast %152 : vector<8x1xf32> to vector<8x128xf32>
    %154 = arith.addf %150, %153 : vector<8x128xf32>
    %c1_90 = arith.constant 1 : index
    %c0_91 = arith.constant 0 : index
    %c0_92 = arith.constant 0 : index
    %155 = vector.load %arg9[%c1_90, %c0_91, %c0_92] : memref<2x32x16xf32, #tpu.memory_space<vmem>>, vector<1x32x16xf32>
    %156 = vector.shape_cast %155 : vector<1x32x16xf32> to vector<32x16xf32>
    %157 = tpu.concatenate %154, %3 in 0 : vector<8x128xf32>, vector<8x128xf32> -> vector<16x128xf32>
    %cst_93 = arith.constant dense<0.000000e+00> : vector<32x128xf32>
    %158 = tpu.matmul %156, %157, %cst_93 {dimension_numbers = #tpu.dot_dimension_numbers<[1], [0], [0], [1], [0, 0, 1, 1], [], []>} : vector<32x16xf32>, vector<16x128xf32>, vector<32x128xf32> -> vector<32x128xf32>
    %c1_94 = arith.constant 1 : index
    %c0_95 = arith.constant 0 : index
    %c0_96 = arith.constant 0 : index
    %159 = vector.load %arg10[%c1_94, %c0_95, %c0_96] : memref<2x32x1xf32, #tpu.memory_space<vmem>>, vector<1x32x1xf32>
    %160 = vector.shape_cast %159 : vector<1x32x1xf32> to vector<32x1xf32>
    %161 = vector.broadcast %160 : vector<32x1xf32> to vector<32x128xf32>
    %162 = arith.addf %158, %161 : vector<32x128xf32>
    %cst_97 = arith.constant 0.000000e+00 : f32
    %163 = vector.broadcast %cst_97 : f32 to vector<32x128xf32>
    %164 = arith.maximumf %162, %163 : vector<32x128xf32>
    %c1_98 = arith.constant 1 : index
    %c0_99 = arith.constant 0 : index
    %c0_100 = arith.constant 0 : index
    %165 = vector.load %arg11[%c1_98, %c0_99, %c0_100] : memref<2x8x32xf32, #tpu.memory_space<vmem>>, vector<1x8x32xf32>
    %166 = vector.shape_cast %165 : vector<1x8x32xf32> to vector<8x32xf32>
    %cst_101 = arith.constant dense<0.000000e+00> : vector<8x128xf32>
    %167 = tpu.matmul %166, %164, %cst_101 {dimension_numbers = #tpu.dot_dimension_numbers<[1], [0], [0], [1], [0, 0, 1, 1], [], []>} : vector<8x32xf32>, vector<32x128xf32>, vector<8x128xf32> -> vector<8x128xf32>
    %c1_102 = arith.constant 1 : index
    %c0_103 = arith.constant 0 : index
    %c0_104 = arith.constant 0 : index
    %168 = vector.load %arg12[%c1_102, %c0_103, %c0_104] : memref<2x8x1xf32, #tpu.memory_space<vmem>>, vector<1x8x1xf32>
    %169 = vector.shape_cast %168 : vector<1x8x1xf32> to vector<8x1xf32>
    %170 = vector.broadcast %169 : vector<8x1xf32> to vector<8x128xf32>
    %171 = arith.addf %167, %170 : vector<8x128xf32>
    %c1_105 = arith.constant 1 : index
    %c0_106 = arith.constant 0 : index
    %c0_107 = arith.constant 0 : index
    %172 = vector.load %arg13[%c1_105, %c0_106, %c0_107] : memref<2x8x1xf32, #tpu.memory_space<vmem>>, vector<1x8x1xf32>
    %173 = vector.shape_cast %172 : vector<1x8x1xf32> to vector<8x1xf32>
    %174 = vector.broadcast %173 : vector<8x1xf32> to vector<8x128xf32>
    %175 = arith.mulf %174, %171 : vector<8x128xf32>
    %176 = arith.addf %175, %92 : vector<8x128xf32>
    %c0_108 = arith.constant 0 : index
    %c0_109 = arith.constant 0 : index
    %c0_110 = arith.constant 0 : index
    %177 = vector.load %arg3[%c0_108, %c0_109, %c0_110] : memref<1x1x128xf32, #tpu.memory_space<vmem>>, vector<1x1x128xf32>
    %178 = vector.shape_cast %177 : vector<1x1x128xf32> to vector<1x128xf32>
    %179 = vector.broadcast %178 : vector<1x128xf32> to vector<8x128xf32>
    %180 = arith.mulf %176, %179 : vector<8x128xf32>
    %c0_111 = arith.constant 0 : index
    %c0_112 = arith.constant 0 : index
    %c0_113 = arith.constant 0 : index
    %181 = vector.load %arg14[%c0_111, %c0_112, %c0_113] : memref<1x8x128xf32, #tpu.memory_space<vmem>>, vector<1x8x128xf32>
    %182 = vector.shape_cast %181 : vector<1x8x128xf32> to vector<8x128xf32>
    %183 = vector.shape_cast %180 : vector<8x128xf32> to vector<1x8x128xf32>
    tpu.vector_store %arg14[%c0_111, %c0_112, %c0_113], %183 {strides = array<i32>} : memref<1x8x128xf32, #tpu.memory_space<vmem>>, vector<1x8x128xf32>,
    return
  }
  func.func @transform_0(%arg0: i32) -> (i32, i32, i32) {
    %c0_i32 = arith.constant 0 : i32
    %c0_i32_0 = arith.constant 0 : i32
    %c0_i32_1 = arith.constant 0 : i32
    return %arg0, %c0_i32, %c0_i32_0 : i32, i32, i32
  }
  func.func @transform_1(%arg0: i32) -> (i32, i32, i32) {
    %c0_i32 = arith.constant 0 : i32
    %c0_i32_0 = arith.constant 0 : i32
    %c0_i32_1 = arith.constant 0 : i32
    return %arg0, %c0_i32, %c0_i32_0 : i32, i32, i32
  }
  func.func @transform_2(%arg0: i32) -> (i32, i32, i32) {
    %c0_i32 = arith.constant 0 : i32
    %c0_i32_0 = arith.constant 0 : i32
    %c0_i32_1 = arith.constant 0 : i32
    return %arg0, %c0_i32, %c0_i32_0 : i32, i32, i32
  }
  func.func @transform_3(%arg0: i32) -> (i32, i32, i32, i32) {
    %c0_i32 = arith.constant 0 : i32
    %c0_i32_0 = arith.constant 0 : i32
    %c0_i32_1 = arith.constant 0 : i32
    %c0_i32_2 = arith.constant 0 : i32
    return %c0_i32, %arg0, %c0_i32_0, %c0_i32_1 : i32, i32, i32, i32
  }
  func.func @transform_4(%arg0: i32) -> (i32, i32, i32, i32) {
    %c0_i32 = arith.constant 0 : i32
    %c0_i32_0 = arith.constant 0 : i32
    %c0_i32_1 = arith.constant 0 : i32
    %c0_i32_2 = arith.constant 0 : i32
    %c0_i32_3 = arith.constant 0 : i32
    return %c0_i32, %c0_i32_0, %c0_i32_1, %c0_i32_2 : i32, i32, i32, i32
  }
  func.func @transform_5(%arg0: i32) -> (i32, i32, i32) {
    %c0_i32 = arith.constant 0 : i32
    %c0_i32_0 = arith.constant 0 : i32
    %c0_i32_1 = arith.constant 0 : i32
    %c0_i32_2 = arith.constant 0 : i32
    return %c0_i32, %c0_i32_0, %c0_i32_1 : i32, i32, i32
  }
  func.func @transform_6(%arg0: i32) -> (i32, i32, i32) {
    %c0_i32 = arith.constant 0 : i32
    %c0_i32_0 = arith.constant 0 : i32
    %c0_i32_1 = arith.constant 0 : i32
    %c0_i32_2 = arith.constant 0 : i32
    return %c0_i32, %c0_i32_0, %c0_i32_1 : i32, i32, i32
  }
  func.func @transform_7(%arg0: i32) -> (i32, i32, i32) {
    %c0_i32 = arith.constant 0 : i32
    %c0_i32_0 = arith.constant 0 : i32
    %c0_i32_1 = arith.constant 0 : i32
    %c0_i32_2 = arith.constant 0 : i32
    return %c0_i32, %c0_i32_0, %c0_i32_1 : i32, i32, i32
  }
  func.func @transform_8(%arg0: i32) -> (i32, i32, i32) {
    %c0_i32 = arith.constant 0 : i32
    %c0_i32_0 = arith.constant 0 : i32
    %c0_i32_1 = arith.constant 0 : i32
    %c0_i32_2 = arith.constant 0 : i32
    return %c0_i32, %c0_i32_0, %c0_i32_1 : i32, i32, i32
  }
  func.func @transform_9(%arg0: i32) -> (i32, i32, i32) {
    %c0_i32 = arith.constant 0 : i32
    %c0_i32_0 = arith.constant 0 : i32
    %c0_i32_1 = arith.constant 0 : i32
    %c0_i32_2 = arith.constant 0 : i32
    return %c0_i32, %c0_i32_0, %c0_i32_1 : i32, i32, i32
  }
  func.func @transform_10(%arg0: i32) -> (i32, i32, i32) {
    %c0_i32 = arith.constant 0 : i32
    %c0_i32_0 = arith.constant 0 : i32
    %c0_i32_1 = arith.constant 0 : i32
    %c0_i32_2 = arith.constant 0 : i32
    return %c0_i32, %c0_i32_0, %c0_i32_1 : i32, i32, i32
  }
  func.func @transform_11(%arg0: i32) -> (i32, i32, i32) {
    %c0_i32 = arith.constant 0 : i32
    %c0_i32_0 = arith.constant 0 : i32
    %c0_i32_1 = arith.constant 0 : i32
    %c0_i32_2 = arith.constant 0 : i32
    return %c0_i32, %c0_i32_0, %c0_i32_1 : i32, i32, i32
  }
  func.func @transform_12(%arg0: i32) -> (i32, i32, i32) {
    %c0_i32 = arith.constant 0 : i32
    %c0_i32_0 = arith.constant 0 : i32
    %c0_i32_1 = arith.constant 0 : i32
    %c0_i32_2 = arith.constant 0 : i32
    return %c0_i32, %c0_i32_0, %c0_i32_1 : i32, i32, i32
  }
  func.func @transform_13(%arg0: i32) -> (i32, i32, i32) {
    %c0_i32 = arith.constant 0 : i32
    %c0_i32_0 = arith.constant 0 : i32
    %c0_i32_1 = arith.constant 0 : i32
    return %arg0, %c0_i32, %c0_i32_0 : i32, i32, i32
  }
}

</mosaic_0001>

<llo_original>
// kernel: tpu_custom_call.1
$region0: #{tpu_custom_call.1}
  #allocation0 [shape = 'u32[]', space=smem, size = 0x4, offset = 0x4, fixed_abs, tag = 'smem constant byte address 0x4 - core index']
  #allocation1 [shape = 'u32[72,128]{1,0:T(1,128)}', space=vmem, size = 0x9000, scoped, tag = 'internal scratch']
  %s0 = inlined_call_operand.vmem [shape: f32[2,8,128], index: 0, kind: input, shape index: {}]
  %s1 = inlined_call_operand.vmem [shape: f32[2,8,128], index: 1, kind: input, shape index: {}]
  %s2 = inlined_call_operand.vmem [shape: f32[2,1,128], index: 2, kind: input, shape index: {}]
  %s3 = inlined_call_operand.vmem [shape: f32[2,2,8,1], index: 3, kind: input, shape index: {}]
  %s4 = inlined_call_operand.vmem [shape: f32[2,3,8,1], index: 4, kind: input, shape index: {}]
  %s5 = inlined_call_operand.vmem [shape: f32[2,8,1], index: 5, kind: input, shape index: {}]
  %s6 = inlined_call_operand.vmem [shape: f32[2,8,1], index: 6, kind: input, shape index: {}]
  %s7 = inlined_call_operand.vmem [shape: f32[2,8,1], index: 7, kind: input, shape index: {}]
  %s8 = inlined_call_operand.vmem [shape: f32[2,32,16], index: 8, kind: input, shape index: {}]
  %s9 = inlined_call_operand.vmem [shape: f32[2,32,1], index: 9, kind: input, shape index: {}]
  %s10 = inlined_call_operand.vmem [shape: f32[2,8,32], index: 10, kind: input, shape index: {}]
  %s11 = inlined_call_operand.vmem [shape: f32[2,8,1], index: 11, kind: input, shape index: {}]
  %s12 = inlined_call_operand.vmem [shape: f32[2,8,1], index: 12, kind: input, shape index: {}]
  %s13 = inlined_call_operand.hbm [shape: f32[2,8,128], index: 13, kind: output, shape index: {}]
  %s14 = sld [smem:[#allocation0]]
  $region123: #{tpu_custom_call.1} parent=0
    _
  %s16 = ssub.s32 1, %s14
  %s17 = scalar_select 0, %s16, %s14
  $region1: #{tpu_custom_call.1} parent=0
    #allocation2 [shape = 'u8[16384]{0}', space=vmem, size = 0x4000, scoped, tag = 'input window, operand 3']
    #allocation3 [shape = 'u8[8192]{0}', space=vmem, size = 0x2000, scoped, tag = 'output window, operand 0']
    #allocation4 [shape = 's32[2]{0}', space=sflag, size = 0x8, scoped, tag = 'scoped memory for tpu_custom_call.1']
    %18 = vsyncpa [#allocation4], 0
    %s19 = scalar_lea.sflag [#allocation4], 1
    %20 = vsyncpa %s19, 0
    loop: start=0, step=1, limit=4
    $region2: #{tpu_custom_call.1} parent=1 // loop_pre_header
      _
    $region3: #{tpu_custom_call.1} parent=1 // loop_header
      %s22 = sphi 0, %s26
      %p23 = scmp.ge.s32.totalorder %s22, 4
      %s32 = sphi 0, %s34
      %s35 = sphi 0, %s32
      %s36 = sphi 0, %s35
      %s52 = sphi 0, %s36
      %s58 = sphi 0, %s60
      %s61 = sphi 0, %s58
      %s62 = sphi 0, %s61
      %s78 = sphi 0, %s62
      %s84 = sphi 0, %s86
      %s87 = sphi 0, %s84
      %s88 = sphi 0, %s87
      %s104 = sphi 0, %s88
      %s110 = sphi 0, %s112
      %s113 = sphi 0, %s110
      %s114 = sphi 0, %s113
      %s130 = sphi 0, %s114
      %s134 = sphi 0, %s134
      %s136 = sphi 0, %s134
      %s137 = sphi 0, %s136
      %s151 = sphi 0, %s137
      %s155 = sphi 0, %s155
      %s157 = sphi 0, %s155
      %s158 = sphi 0, %s157
      %s172 = sphi 0, %s158
      %s176 = sphi 0, %s176
      %s178 = sphi 0, %s176
      %s179 = sphi 0, %s178
      %s193 = sphi 0, %s179
      %s197 = sphi 0, %s197
      %s199 = sphi 0, %s197
      %s200 = sphi 0, %s199
      %s214 = sphi 0, %s200
      %s218 = sphi 0, %s218
      %s220 = sphi 0, %s218
      %s221 = sphi 0, %s220
      %s235 = sphi 0, %s221
      %s239 = sphi 0, %s239
      %s241 = sphi 0, %s239
      %s242 = sphi 0, %s241
      %s256 = sphi 0, %s242
      %s260 = sphi 0, %s260
      %s262 = sphi 0, %s260
      %s263 = sphi 0, %s262
      %s277 = sphi 0, %s263
      %s281 = sphi 0, %s281
      %s283 = sphi 0, %s281
      %s284 = sphi 0, %s283
      %s298 = sphi 0, %s284
      %s302 = sphi 0, %s302
      %s304 = sphi 0, %s302
      %s305 = sphi 0, %s304
      %s319 = sphi 0, %s305
      %s325 = sphi 0, %s327
      %s328 = sphi 0, %s325
      %s329 = sphi 0, %s328
      %s345 = sphi 0, %s329
    $region4: #{tpu_custom_call.1} parent=1 // loop_header_branch
      %25 = sbr.rel (%p23) target = $region8
    $region5: #{tpu_custom_call.1} parent=1 // loop_body
      %s27 = ssub.s32 %s22, 1
      %s28 = ssub.s32 %s22, 2
      %s29 = sadd.s32 %s22, 1
      %s30 = ssub.s32 %s22, %s29
      %p31 = scmp.eq.s32.totalorder %s30, 0
      %s33 = sadd.s32 %s32, 1
      %s34 = scalar_select %p31, %s32, %s33
      %p37 = pneg %p31
      %p38 = scmp.eq.s32.totalorder %s22, 1
      %p39 = por %p37, %p38
      %p40 = scmp.ne.s32.totalorder %s32, %s35
      %p41 = scmp.eq.s32.totalorder %s22, 0
      %p42 = por %p40, %p41
      %p43 = scmp.ne.s32.totalorder %s32, %s35
      %p44 = scmp.eq.s32.totalorder %s27, 1
      %p45 = por %p43, %p44
      %p46 = scmp.ne.s32.totalorder %s35, %s36
      %p47 = scmp.eq.s32.totalorder %s27, 0
      %p48 = por %p46, %p47
      %p49 = scmp.ne.s32.totalorder %s35, %s36
      %p50 = scmp.eq.s32.totalorder %s28, 1
      %p51 = por %p49, %p50
      %p53 = scmp.ne.s32.totalorder %s36, %s52
      %p54 = scmp.eq.s32.totalorder %s28, 0
      %p55 = por %p53, %p54
      %s56 = ssub.s32 %s22, %s29
      %p57 = scmp.eq.s32.totalorder %s56, 0
      %s59 = sadd.s32 %s58, 1
      %s60 = scalar_select %p57, %s58, %s59
      %p63 = pneg %p57
      %p64 = scmp.eq.s32.totalorder %s22, 1
      %p65 = por %p63, %p64
      %p66 = scmp.ne.s32.totalorder %s58, %s61
      %p67 = scmp.eq.s32.totalorder %s22, 0
      %p68 = por %p66, %p67
      %p69 = scmp.ne.s32.totalorder %s58, %s61
      %p70 = scmp.eq.s32.totalorder %s27, 1
      %p71 = por %p69, %p70
      %p72 = scmp.ne.s32.totalorder %s61, %s62
      %p73 = scmp.eq.s32.totalorder %s27, 0
      %p74 = por %p72, %p73
      %p75 = scmp.ne.s32.totalorder %s61, %s62
      %p76 = scmp.eq.s32.totalorder %s28, 1
      %p77 = por %p75, %p76
      %p79 = scmp.ne.s32.totalorder %s62, %s78
      %p80 = scmp.eq.s32.totalorder %s28, 0
      %p81 = por %p79, %p80
      %s82 = ssub.s32 %s22, %s29
      %p83 = scmp.eq.s32.totalorder %s82, 0
      %s85 = sadd.s32 %s84, 1
      %s86 = scalar_select %p83, %s84, %s85
      %p89 = pneg %p83
      %p90 = scmp.eq.s32.totalorder %s22, 1
      %p91 = por %p89, %p90
      %p92 = scmp.ne.s32.totalorder %s84, %s87
      %p93 = scmp.eq.s32.totalorder %s22, 0
      %p94 = por %p92, %p93
      %p95 = scmp.ne.s32.totalorder %s84, %s87
      %p96 = scmp.eq.s32.totalorder %s27, 1
      %p97 = por %p95, %p96
      %p98 = scmp.ne.s32.totalorder %s87, %s88
      %p99 = scmp.eq.s32.totalorder %s27, 0
      %p100 = por %p98, %p99
      %p101 = scmp.ne.s32.totalorder %s87, %s88
      %p102 = scmp.eq.s32.totalorder %s28, 1
      %p103 = por %p101, %p102
      %p105 = scmp.ne.s32.totalorder %s88, %s104
      %p106 = scmp.eq.s32.totalorder %s28, 0
      %p107 = por %p105, %p106
      %s108 = ssub.s32 %s22, %s29
      %p109 = scmp.eq.s32.totalorder %s108, 0
      %s111 = sadd.s32 %s110, 1
      %s112 = scalar_select %p109, %s110, %s111
      %p115 = pneg %p109
      %p116 = scmp.eq.s32.totalorder %s22, 1
      %p117 = por %p115, %p116
      %p118 = scmp.ne.s32.totalorder %s110, %s113
      %p119 = scmp.eq.s32.totalorder %s22, 0
      %p120 = por %p118, %p119
      %p121 = scmp.ne.s32.totalorder %s110, %s113
      %p122 = scmp.eq.s32.totalorder %s27, 1
      %p123 = por %p121, %p122
      %p124 = scmp.ne.s32.totalorder %s113, %s114
      %p125 = scmp.eq.s32.totalorder %s27, 0
      %p126 = por %p124, %p125
      %p127 = scmp.ne.s32.totalorder %s113, %s114
      %p128 = scmp.eq.s32.totalorder %s28, 1
      %p129 = por %p127, %p128
      %p131 = scmp.ne.s32.totalorder %s114, %s130
      %p132 = scmp.eq.s32.totalorder %s28, 0
      %p133 = por %p131, %p132
      %s135 = sadd.s32 %s134, 1
      %p138 = scmp.eq.s32.totalorder %s22, 1
      %p139 = scmp.ne.s32.totalorder %s134, %s136
      %p140 = scmp.eq.s32.totalorder %s22, 0
      %p141 = por %p139, %p140
      %p142 = scmp.ne.s32.totalorder %s134, %s136
      %p143 = scmp.eq.s32.totalorder %s27, 1
      %p144 = por %p142, %p143
      %p145 = scmp.ne.s32.totalorder %s136, %s137
      %p146 = scmp.eq.s32.totalorder %s27, 0
      %p147 = por %p145, %p146
      %p148 = scmp.ne.s32.totalorder %s136, %s137
      %p149 = scmp.eq.s32.totalorder %s28, 1
      %p150 = por %p148, %p149
      %p152 = scmp.ne.s32.totalorder %s137, %s151
      %p153 = scmp.eq.s32.totalorder %s28, 0
      %p154 = por %p152, %p153
      %s156 = sadd.s32 %s155, 1
      %p159 = scmp.eq.s32.totalorder %s22, 1
      %p160 = scmp.ne.s32.totalorder %s155, %s157
      %p161 = scmp.eq.s32.totalorder %s22, 0
      %p162 = por %p160, %p161
      %p163 = scmp.ne.s32.totalorder %s155, %s157
      %p164 = scmp.eq.s32.totalorder %s27, 1
      %p165 = por %p163, %p164
      %p166 = scmp.ne.s32.totalorder %s157, %s158
      %p167 = scmp.eq.s32.totalorder %s27, 0
      %p168 = por %p166, %p167
      %p169 = scmp.ne.s32.totalorder %s157, %s158
      %p170 = scmp.eq.s32.totalorder %s28, 1
      %p171 = por %p169, %p170
      %p173 = scmp.ne.s32.totalorder %s158, %s172
      %p174 = scmp.eq.s32.totalorder %s28, 0
      %p175 = por %p173, %p174
      %s177 = sadd.s32 %s176, 1
      %p180 = scmp.eq.s32.totalorder %s22, 1
      %p181 = scmp.ne.s32.totalorder %s176, %s178
      %p182 = scmp.eq.s32.totalorder %s22, 0
      %p183 = por %p181, %p182
      %p184 = scmp.ne.s32.totalorder %s176, %s178
      %p185 = scmp.eq.s32.totalorder %s27, 1
      %p186 = por %p184, %p185
      %p187 = scmp.ne.s32.totalorder %s178, %s179
      %p188 = scmp.eq.s32.totalorder %s27, 0
      %p189 = por %p187, %p188
      %p190 = scmp.ne.s32.totalorder %s178, %s179
      %p191 = scmp.eq.s32.totalorder %s28, 1
      %p192 = por %p190, %p191
      %p194 = scmp.ne.s32.totalorder %s179, %s193
      %p195 = scmp.eq.s32.totalorder %s28, 0
      %p196 = por %p194, %p195
      %s198 = sadd.s32 %s197, 1
      %p201 = scmp.eq.s32.totalorder %s22, 1
      %p202 = scmp.ne.s32.totalorder %s197, %s199
      %p203 = scmp.eq.s32.totalorder %s22, 0
      %p204 = por %p202, %p203
      %p205 = scmp.ne.s32.totalorder %s197, %s199
      %p206 = scmp.eq.s32.totalorder %s27, 1
      %p207 = por %p205, %p206
      %p208 = scmp.ne.s32.totalorder %s199, %s200
      %p209 = scmp.eq.s32.totalorder %s27, 0
      %p210 = por %p208, %p209
      %p211 = scmp.ne.s32.totalorder %s199, %s200
      %p212 = scmp.eq.s32.totalorder %s28, 1
      %p213 = por %p211, %p212
      %p215 = scmp.ne.s32.totalorder %s200, %s214
      %p216 = scmp.eq.s32.totalorder %s28, 0
      %p217 = por %p215, %p216
      %s219 = sadd.s32 %s218, 1
      %p222 = scmp.eq.s32.totalorder %s22, 1
      %p223 = scmp.ne.s32.totalorder %s218, %s220
      %p224 = scmp.eq.s32.totalorder %s22, 0
      %p225 = por %p223, %p224
      %p226 = scmp.ne.s32.totalorder %s218, %s220
      %p227 = scmp.eq.s32.totalorder %s27, 1
      %p228 = por %p226, %p227
      %p229 = scmp.ne.s32.totalorder %s220, %s221
      %p230 = scmp.eq.s32.totalorder %s27, 0
      %p231 = por %p229, %p230
      %p232 = scmp.ne.s32.totalorder %s220, %s221
      %p233 = scmp.eq.s32.totalorder %s28, 1
      %p234 = por %p232, %p233
      %p236 = scmp.ne.s32.totalorder %s221, %s235
      %p237 = scmp.eq.s32.totalorder %s28, 0
      %p238 = por %p236, %p237
      %s240 = sadd.s32 %s239, 1
      %p243 = scmp.eq.s32.totalorder %s22, 1
      %p244 = scmp.ne.s32.totalorder %s239, %s241
      %p245 = scmp.eq.s32.totalorder %s22, 0
      %p246 = por %p244, %p245
      %p247 = scmp.ne.s32.totalorder %s239, %s241
      %p248 = scmp.eq.s32.totalorder %s27, 1
      %p249 = por %p247, %p248
      %p250 = scmp.ne.s32.totalorder %s241, %s242
      %p251 = scmp.eq.s32.totalorder %s27, 0
      %p252 = por %p250, %p251
      %p253 = scmp.ne.s32.totalorder %s241, %s242
      %p254 = scmp.eq.s32.totalorder %s28, 1
      %p255 = por %p253, %p254
      %p257 = scmp.ne.s32.totalorder %s242, %s256
      %p258 = scmp.eq.s32.totalorder %s28, 0
      %p259 = por %p257, %p258
      %s261 = sadd.s32 %s260, 1
      %p264 = scmp.eq.s32.totalorder %s22, 1
      %p265 = scmp.ne.s32.totalorder %s260, %s262
      %p266 = scmp.eq.s32.totalorder %s22, 0
      %p267 = por %p265, %p266
      %p268 = scmp.ne.s32.totalorder %s260, %s262
      %p269 = scmp.eq.s32.totalorder %s27, 1
      %p270 = por %p268, %p269
      %p271 = scmp.ne.s32.totalorder %s262, %s263
      %p272 = scmp.eq.s32.totalorder %s27, 0
      %p273 = por %p271, %p272
      %p274 = scmp.ne.s32.totalorder %s262, %s263
      %p275 = scmp.eq.s32.totalorder %s28, 1
      %p276 = por %p274, %p275
      %p278 = scmp.ne.s32.totalorder %s263, %s277
      %p279 = scmp.eq.s32.totalorder %s28, 0
      %p280 = por %p278, %p279
      %s282 = sadd.s32 %s281, 1
      %p285 = scmp.eq.s32.totalorder %s22, 1
      %p286 = scmp.ne.s32.totalorder %s281, %s283
      %p287 = scmp.eq.s32.totalorder %s22, 0
      %p288 = por %p286, %p287
      %p289 = scmp.ne.s32.totalorder %s281, %s283
      %p290 = scmp.eq.s32.totalorder %s27, 1
      %p291 = por %p289, %p290
      %p292 = scmp.ne.s32.totalorder %s283, %s284
      %p293 = scmp.eq.s32.totalorder %s27, 0
      %p294 = por %p292, %p293
      %p295 = scmp.ne.s32.totalorder %s283, %s284
      %p296 = scmp.eq.s32.totalorder %s28, 1
      %p297 = por %p295, %p296
      %p299 = scmp.ne.s32.totalorder %s284, %s298
      %p300 = scmp.eq.s32.totalorder %s28, 0
      %p301 = por %p299, %p300
      %s303 = sadd.s32 %s302, 1
      %p306 = scmp.eq.s32.totalorder %s22, 1
      %p307 = scmp.ne.s32.totalorder %s302, %s304
      %p308 = scmp.eq.s32.totalorder %s22, 0
      %p309 = por %p307, %p308
      %p310 = scmp.ne.s32.totalorder %s302, %s304
      %p311 = scmp.eq.s32.totalorder %s27, 1
      %p312 = por %p310, %p311
      %p313 = scmp.ne.s32.totalorder %s304, %s305
      %p314 = scmp.eq.s32.totalorder %s27, 0
      %p315 = por %p313, %p314
      %p316 = scmp.ne.s32.totalorder %s304, %s305
      %p317 = scmp.eq.s32.totalorder %s28, 1
      %p318 = por %p316, %p317
      %p320 = scmp.ne.s32.totalorder %s305, %s319
      %p321 = scmp.eq.s32.totalorder %s28, 0
      %p322 = por %p320, %p321
      %s323 = ssub.s32 %s22, %s29
      %p324 = scmp.eq.s32.totalorder %s323, 0
      %s326 = sadd.s32 %s325, 1
      %s327 = scalar_select %p324, %s325, %s326
      %p330 = pneg %p324
      %p331 = scmp.eq.s32.totalorder %s22, 1
      %p332 = por %p330, %p331
      %p333 = scmp.ne.s32.totalorder %s325, %s328
      %p334 = scmp.eq.s32.totalorder %s22, 0
      %p335 = por %p333, %p334
      %p336 = scmp.ne.s32.totalorder %s325, %s328
      %p337 = scmp.eq.s32.totalorder %s27, 1
      %p338 = por %p336, %p337
      %p339 = scmp.ne.s32.totalorder %s328, %s329
      %p340 = scmp.eq.s32.totalorder %s27, 0
      %p341 = por %p339, %p340
      %p342 = scmp.ne.s32.totalorder %s328, %s329
      %p343 = scmp.eq.s32.totalorder %s28, 1
      %p344 = por %p342, %p343
      %p346 = scmp.ne.s32.totalorder %s329, %s345
      %p347 = scmp.eq.s32.totalorder %s28, 0
      %p348 = por %p346, %p347
      %p349 = scmp.le.s32.totalorder 1, %s22
      %p350 = scmp.lt.s32.totalorder %s22, 3
      %p351 = pnand %p349, %p350
      %p352 = pneg %p351
      // Predicated region
      $region9: #{tpu_custom_call.1} parent=5 // pred_check
        _
      $region10: #{tpu_custom_call.1} parent=5 // pred_check_branch
        %354 = sbr.rel (%p351) target = $region12
      $region11: #{tpu_custom_call.1} parent=5 // pred_region
        %s355 = ssub.s32 %s22, 1
        // Predicated region
        $region13: #{tpu_custom_call.1} parent=11 // pred_check
          %p356 = pneg %p147
        $region14: #{tpu_custom_call.1} parent=11 // pred_check_branch
          %358 = sbr.rel (%p356) target = $region16
        $region15: #{tpu_custom_call.1} parent=11 // pred_region
          _
        $region16: #{tpu_custom_call.1} parent=11 // pred_fallthru
          _
        // Predicated region
        $region17: #{tpu_custom_call.1} parent=11 // pred_check
          %p359 = pneg %p168
        $region18: #{tpu_custom_call.1} parent=11 // pred_check_branch
          %361 = sbr.rel (%p359) target = $region20
        $region19: #{tpu_custom_call.1} parent=11 // pred_region
          _
        $region20: #{tpu_custom_call.1} parent=11 // pred_fallthru
          _
        // Predicated region
        $region21: #{tpu_custom_call.1} parent=11 // pred_check
          %p362 = pneg %p189
        $region22: #{tpu_custom_call.1} parent=11 // pred_check_branch
          %364 = sbr.rel (%p362) target = $region24
        $region23: #{tpu_custom_call.1} parent=11 // pred_region
          _
        $region24: #{tpu_custom_call.1} parent=11 // pred_fallthru
          _
        // Predicated region
        $region25: #{tpu_custom_call.1} parent=11 // pred_check
          %p365 = pneg %p210
        $region26: #{tpu_custom_call.1} parent=11 // pred_check_branch
          %367 = sbr.rel (%p365) target = $region28
        $region27: #{tpu_custom_call.1} parent=11 // pred_region
          _
        $region28: #{tpu_custom_call.1} parent=11 // pred_fallthru
          _
        // Predicated region
        $region29: #{tpu_custom_call.1} parent=11 // pred_check
          %p368 = pneg %p231
        $region30: #{tpu_custom_call.1} parent=11 // pred_check_branch
          %370 = sbr.rel (%p368) target = $region32
        $region31: #{tpu_custom_call.1} parent=11 // pred_region
          _
        $region32: #{tpu_custom_call.1} parent=11 // pred_fallthru
          _
        // Predicated region
        $region33: #{tpu_custom_call.1} parent=11 // pred_check
          %p371 = pneg %p252
        $region34: #{tpu_custom_call.1} parent=11 // pred_check_branch
          %373 = sbr.rel (%p371) target = $region36
        $region35: #{tpu_custom_call.1} parent=11 // pred_region
          _
        $region36: #{tpu_custom_call.1} parent=11 // pred_fallthru
          _
        // Predicated region
        $region37: #{tpu_custom_call.1} parent=11 // pred_check
          %p374 = pneg %p273
        $region38: #{tpu_custom_call.1} parent=11 // pred_check_branch
          %376 = sbr.rel (%p374) target = $region40
        $region39: #{tpu_custom_call.1} parent=11 // pred_region
          _
        $region40: #{tpu_custom_call.1} parent=11 // pred_fallthru
          _
        // Predicated region
        $region41: #{tpu_custom_call.1} parent=11 // pred_check
          %p377 = pneg %p294
        $region42: #{tpu_custom_call.1} parent=11 // pred_check_branch
          %379 = sbr.rel (%p377) target = $region44
        $region43: #{tpu_custom_call.1} parent=11 // pred_region
          _
        $region44: #{tpu_custom_call.1} parent=11 // pred_fallthru
          _
        // Predicated region
        $region45: #{tpu_custom_call.1} parent=11 // pred_check
          %p380 = pneg %p315
        $region46: #{tpu_custom_call.1} parent=11 // pred_check_branch
          %382 = sbr.rel (%p380) target = $region48
        $region47: #{tpu_custom_call.1} parent=11 // pred_region
          _
        $region48: #{tpu_custom_call.1} parent=11 // pred_fallthru
          _
      $region12: #{tpu_custom_call.1} parent=5 // pred_fallthru
        _
      %p383 = scmp.lt.s32.totalorder %s22, 2
      // Predicated region
      $region49: #{tpu_custom_call.1} parent=5 // pred_check
        %p384 = pneg %p383
      $region50: #{tpu_custom_call.1} parent=5 // pred_check_branch
        %386 = sbr.rel (%p384) target = $region52
      $region51: #{tpu_custom_call.1} parent=5 // pred_region
        // Predicated region
        $region53: #{tpu_custom_call.1} parent=51 // pred_check
          %p387 = pneg %p42
        $region54: #{tpu_custom_call.1} parent=51 // pred_check_branch
          %389 = sbr.rel (%p387) target = $region56
        $region55: #{tpu_custom_call.1} parent=51 // pred_region
          %p390 = scmp.lt.s32.totalorder %s22, 1
          %s391 = scalar_select %p390, %s22, 1
          %s392 = smul.addr %s391, 8
          %s393 = scalar_lea.vmem %s0, %s392
        $region56: #{tpu_custom_call.1} parent=51 // pred_fallthru
          _
        // Predicated region
        $region57: #{tpu_custom_call.1} parent=51 // pred_check
          %p394 = pneg %p68
        $region58: #{tpu_custom_call.1} parent=51 // pred_check_branch
          %396 = sbr.rel (%p394) target = $region60
        $region59: #{tpu_custom_call.1} parent=51 // pred_region
          %p397 = scmp.lt.s32.totalorder %s22, 1
          %s398 = scalar_select %p397, %s22, 1
          %s399 = smul.addr %s398, 8
          %s400 = scalar_lea.vmem %s1, %s399
        $region60: #{tpu_custom_call.1} parent=51 // pred_fallthru
          _
        // Predicated region
        $region61: #{tpu_custom_call.1} parent=51 // pred_check
          %p401 = pneg %p94
        $region62: #{tpu_custom_call.1} parent=51 // pred_check_branch
          %403 = sbr.rel (%p401) target = $region64
        $region63: #{tpu_custom_call.1} parent=51 // pred_region
          %p404 = scmp.lt.s32.totalorder %s22, 1
          %s405 = scalar_select %p404, %s22, 1
          %s406 = scalar_lea.vmem %s2, %s405
        $region64: #{tpu_custom_call.1} parent=51 // pred_fallthru
          _
        // Predicated region
        $region65: #{tpu_custom_call.1} parent=51 // pred_check
          %p407 = pneg %p120
        $region66: #{tpu_custom_call.1} parent=51 // pred_check_branch
          %409 = sbr.rel (%p407) target = $region68
        $region67: #{tpu_custom_call.1} parent=51 // pred_region
          %s410 = sand.u32 %s110, 1
          %s411 = sand.u32 %s110, 1
          %s412 = smul.addr %s411, 16
          %s413 = scalar_lea.vmem [#allocation2], %s412
          %s414 = smul.addr %s22, 8
          %s415 = scalar_lea.vmem %s3, %s414
          // Predicated region
          $region69: #{tpu_custom_call.1} parent=67 // pred_check
            _
          $region70: #{tpu_custom_call.1} parent=67 // pred_check_branch
            %417 = sbr.rel (0) target = $region72
          $region71: #{tpu_custom_call.1} parent=67 // pred_region
            // Predicated region
            $region73: #{tpu_custom_call.1} parent=71 // pred_check
              _
            $region74: #{tpu_custom_call.1} parent=71 // pred_check_branch
              %419 = sbr.rel (0) target = $region76
            $region75: #{tpu_custom_call.1} parent=71 // pred_region
              // Predicated region
              $region88: #{tpu_custom_call.1} parent=75 // pred_check
                _
              $region89: #{tpu_custom_call.1} parent=75 // pred_check_branch
                %437 = sbr.rel (0) target = $region91
              $region90: #{tpu_custom_call.1} parent=75 // pred_region
                loop: start=0, step=1, limit=1
                $region92: #{tpu_custom_call.1} parent=90 // loop_pre_header
                  _
                $region93: #{tpu_custom_call.1} parent=90 // loop_header
                  %s439 = sphi 0, %s443
                  %p440 = scmp.ge.s32.totalorder %s439, 1
                  %s444 = sphi %s415, %s415
                  %s445 = sphi %s413, %s413
                $region94: #{tpu_custom_call.1} parent=90 // loop_header_branch
                  %442 = sbr.rel (%p440) target = $region98
                $region95: #{tpu_custom_call.1} parent=90 // loop_body
                  %v446 = vld [vmem:[%s444] sm:$0xff]
                  %447 = vst [vmem:[%s445] sm:$0xff] %v446
                  %v448 = vld [vmem:[%s444 + $0x10] sm:$0xff]
                  %449 = vst [vmem:[%s445 + $0x8] sm:$0xff] %v448
                $region96: #{tpu_custom_call.1} parent=90 // loop_footer
                  %s443 = sadd.s32 1, %s439
                $region97: #{tpu_custom_call.1} parent=90 // loop_footer_branch
                  %438 = sbr.rel target = $region93
                $region98: #{tpu_custom_call.1} parent=90 // loop_exit
                  _
              $region91: #{tpu_custom_call.1} parent=75 // pred_fallthru
                _
              // Predicated region
              $region99: #{tpu_custom_call.1} parent=75 // pred_check
                _
              $region100: #{tpu_custom_call.1} parent=75 // pred_check_branch
                %451 = sbr.rel target = $region102
              $region101: #{tpu_custom_call.1} parent=75 // pred_region
                _
              $region102: #{tpu_custom_call.1} parent=75 // pred_fallthru
                _
            $region76: #{tpu_custom_call.1} parent=71 // pred_fallthru
              _
            // Predicated region
            $region77: #{tpu_custom_call.1} parent=71 // pred_check
              _
            $region78: #{tpu_custom_call.1} parent=71 // pred_check_branch
              %421 = sbr.rel target = $region80
            $region79: #{tpu_custom_call.1} parent=71 // pred_region
              %s423 = ssub.s32 256, 1
              loop: start=0, step=1, limit=1
              $region81: #{tpu_custom_call.1} parent=79 // loop_pre_header
                _
              $region82: #{tpu_custom_call.1} parent=79 // loop_header
                %s425 = sphi 0, %s429
                %p426 = scmp.ge.s32.totalorder %s425, 1
                %s430 = sphi %s415, %s415
                %s431 = sphi %s413, %s413
              $region83: #{tpu_custom_call.1} parent=79 // loop_header_branch
                %428 = sbr.rel (%p426) target = $region87
              $region84: #{tpu_custom_call.1} parent=79 // loop_body
                %v432 = vld [vmem:[%s430] sm:%s423]
                %433 = vst [vmem:[%s431] sm:%s423] %v432
                %v434 = vld [vmem:[%s430 + $0x10] sm:%s423]
                %435 = vst [vmem:[%s431 + $0x8] sm:%s423] %v434
              $region85: #{tpu_custom_call.1} parent=79 // loop_footer
                %s429 = sadd.s32 1, %s425
              $region86: #{tpu_custom_call.1} parent=79 // loop_footer_branch
                %424 = sbr.rel target = $region82
              $region87: #{tpu_custom_call.1} parent=79 // loop_exit
                _
            $region80: #{tpu_custom_call.1} parent=71 // pred_fallthru
              _
          $region72: #{tpu_custom_call.1} parent=67 // pred_fallthru
            _
          %452 = vnop
        $region68: #{tpu_custom_call.1} parent=51 // pred_fallthru
          _
      $region52: #{tpu_custom_call.1} parent=5 // pred_fallthru
        _
      %p453 = scmp.le.s32.totalorder 1, %s22
      %p454 = scmp.lt.s32.totalorder %s22, 3
      %p455 = pnand %p453, %p454
      %p456 = pneg %p455
      // Predicated region
      $region103: #{tpu_custom_call.1} parent=5 // pred_check
        _
      $region104: #{tpu_custom_call.1} parent=5 // pred_check_branch
        %458 = sbr.rel (%p455) target = $region106
      $region105: #{tpu_custom_call.1} parent=5 // pred_region
        %s459 = ssub.s32 %s22, 1
        %s460 = sand.u32 %s113, 1
        %s461 = sand.u32 %s113, 1
        %s462 = smul.addr %s461, 16
        %s463 = scalar_lea.vmem [#allocation2], %s462
        // Predicated region
        $region107: #{tpu_custom_call.1} parent=105 // pred_check
          %p464 = pneg %p126
        $region108: #{tpu_custom_call.1} parent=105 // pred_check_branch
          %466 = sbr.rel (%p464) target = $region110
        $region109: #{tpu_custom_call.1} parent=105 // pred_region
          _
        $region110: #{tpu_custom_call.1} parent=105 // pred_fallthru
          _
        %p467 = scmp.lt.s32.totalorder %s27, 1
        %s468 = scalar_select %p467, %s27, 1
        %s469 = smul.addr %s468, 8
        %s470 = scalar_lea.vmem %s0, %s469
        %p471 = pneg %p48
        %p472 = pneg %p45
        %p473 = scmp.lt.s32.totalorder %s27, 1
        %s474 = scalar_select %p473, %s27, 1
        %s475 = smul.addr %s474, 8
        %s476 = scalar_lea.vmem %s1, %s475
        %p477 = pneg %p74
        %p478 = pneg %p71
        %p479 = scmp.lt.s32.totalorder %s27, 1
        %s480 = scalar_select %p479, %s27, 1
        %s481 = scalar_lea.vmem %s2, %s480
        %p482 = pneg %p100
        %p483 = pneg %p97
        %s484 = sand.u32 %s113, 1
        %s485 = sand.u32 %s113, 1
        %s486 = smul.addr %s485, 16
        %s487 = scalar_lea.vmem [#allocation2], %s486
        %p488 = pneg %p126
        %p489 = pneg %p123
        %p490 = pneg %p147
        %p491 = pneg %p144
        %p492 = pneg %p168
        %p493 = pneg %p165
        %p494 = pneg %p189
        %p495 = pneg %p186
        %p496 = pneg %p210
        %p497 = pneg %p207
        %p498 = pneg %p231
        %p499 = pneg %p228
        %p500 = pneg %p252
        %p501 = pneg %p249
        %p502 = pneg %p273
        %p503 = pneg %p270
        %p504 = pneg %p294
        %p505 = pneg %p291
        %p506 = pneg %p315
        %p507 = pneg %p312
        %p508 = pneg %p341
        %p509 = pneg %p338
        %s510 = sand.u32 %s328, 1
        %s511 = scalar_lea.sflag [#allocation4], %s510
        %s512 = sand.u32 %s328, 1
        %s513 = smul.addr %s512, 8
        %s514 = scalar_lea.vmem [#allocation3], %s513
        %p515 = scmp.lt.s32.totalorder %s27, 1
        %s516 = scalar_select %p515, %s27, 1
        %s517 = smul.addr %s516, 8
        %s518 = scalar_lea.vmem %s0, %s517
        %p519 = scmp.lt.s32.totalorder %s27, 1
        %s520 = scalar_select %p519, %s27, 1
        %s521 = smul.addr %s520, 8
        %s522 = scalar_lea.vmem %s1, %s521
        %p523 = scmp.lt.s32.totalorder %s27, 1
        %s524 = scalar_select %p523, %s27, 1
        %s525 = scalar_lea.vmem %s2, %s524
        %v526 = vld [vmem:[%s518] sm:$0xff]
        %v527 = vld [vmem:[%s522] sm:$0xff]
        %v528 = vlaneseq
        %v529 = vand.u32 %v528, 127
        %vm530 = vcmp.ge.s32.totalorder %v529, 1
        %vm531 = vcmp.lt.s32.totalorder %v529, 127
        %532 = vrot.lane.b32.xlu0 %v526, 1
        %v533 = vpop.permute.xlu0 %532
        %v534 = vsel %vm530, %v533, 0.0
        %v535 = vld [vmem:[%s4] sm:$0xff]
        %537 = vset.pattern.permute.xlu0 0
        %538 = vperm.xlu0 %537, %v535
        %v539 = vpop.permute.xlu0 %538
        %v541 = vmul.f32 %v539, %v534
        %v542 = vadd.f32 %v541, 0.0
        %s543 = scalar_lea.vmem %s4, 8
        %v544 = vld [vmem:[%s543] sm:$0xff]
        %546 = vset.pattern.permute.xlu0 0
        %547 = vperm.xlu0 %546, %v544
        %v548 = vpop.permute.xlu0 %547
        %v550 = vmul.f32 %v548, %v526
        %v551 = vadd.f32 %v542, %v550
        %552 = vrot.lane.b32.xlu0 %v526, 127
        %v553 = vpop.permute.xlu0 %552
        %v554 = vsel %vm531, %v553, 0.0
        %s555 = scalar_lea.vmem %s4, 16
        %v556 = vld [vmem:[%s555] sm:$0xff]
        %558 = vset.pattern.permute.xlu0 0
        %559 = vperm.xlu0 %558, %v556
        %v560 = vpop.permute.xlu0 %559
        %v562 = vmul.f32 %v560, %v554
        %v563 = vadd.f32 %v551, %v562
        %v564 = vld [vmem:[%s5] sm:$0xff]
        %566 = vset.pattern.permute.xlu0 0
        %567 = vperm.xlu0 %566, %v564
        %v568 = vpop.permute.xlu0 %567
        %v570 = vadd.f32 %v563, %v568
        %v571 = vld [vmem:[%s463] sm:$0xff]
        %573 = vset.pattern.permute.xlu0 0
        %574 = vperm.xlu0 %573, %v571
        %v575 = vpop.permute.xlu0 %574
        %v577 = vadd.f32 %v570, %v575
        %578 = vadd.xlane.f32.xlu0 %v577
        %v579 = vpop.xlane.xlu0 %578
        %v580 = vrot.slane %v579, 4
        %v581 = vadd.f32 %v579, %v580
        %v582 = vrot.slane %v581, 2
        %v583 = vadd.f32 %v581, %v582
        %v584 = vrot.slane %v583, 1
        %v585 = vadd.f32 %v583, %v584
        %s586 = vtos %v585
        %v587 = vstv %s586
        %v588 = vrcp.pop 1024.0
        %v589 = vmul.f32 1024.0, %v588
        %v590 = vsub.f32 1.0, %v589
        %v591 = vmul.f32 %v588, %v590
        %v592 = vadd.f32 %v588, %v591
        %vm593 = vweird.f32 %v588
        %v594 = vsel %vm593, %v588, %v592
        %v595 = vmul.f32 %v587, %v594
        %v596 = vsub.f32 %v577, %v595
        %v597 = vmul.f32 %v596, %v596
        %598 = vadd.xlane.f32.xlu0 %v597
        %v599 = vpop.xlane.xlu0 %598
        %v600 = vrot.slane %v599, 4
        %v601 = vadd.f32 %v599, %v600
        %v602 = vrot.slane %v601, 2
        %v603 = vadd.f32 %v601, %v602
        %v604 = vrot.slane %v603, 1
        %v605 = vadd.f32 %v603, %v604
        %s606 = vtos %v605
        %v607 = vstv %s606
        %v608 = vmul.f32 %v607, %v594
        %v609 = vadd.f32 %v608, 1e-05
        %v610 = vrsqrt.pop %v609
        %v611 = vmul.f32 %v610, %v609
        %v612 = vmul.f32 %v611, %v610
        %v613 = vmul.f32 0.5, %v612
        %v614 = vsub.f32 1.5, %v613
        %v615 = vmul.f32 %v610, %v614
        %vm616 = vweird.f32 %v609
        %vm617 = vweird.f32 %v610
        %vm618 = vmor %vm616, %vm617
        %v619 = vsel %vm618, %v610, %v615
        %v620 = vmul.f32 %v596, %v619
        %v621 = vld [vmem:[%s6] sm:$0xff]
        %623 = vset.pattern.permute.xlu0 0
        %624 = vperm.xlu0 %623, %v621
        %v625 = vpop.permute.xlu0 %624
        %v627 = vmul.f32 %v625, %v620
        %v628 = vld [vmem:[%s7] sm:$0xff]
        %630 = vset.pattern.permute.xlu0 0
        %631 = vperm.xlu0 %630, %v628
        %v632 = vpop.permute.xlu0 %631
        %v634 = vadd.f32 %v627, %v632
        %v635 = vld [vmem:[%s8] sm:$0xff]
        %v636 = vld [vmem:[%s8 + $0x8] sm:$0xff]
        %v637 = vld [vmem:[%s8 + $0x10] sm:$0xff]
        %v638 = vld [vmem:[%s8 + $0x18] sm:$0xff]
        %v639 = vld [vmem:[%s9] sm:$0xff]
        %v640 = vld [vmem:[%s9 + $0x8] sm:$0xff]
        %v641 = vld [vmem:[%s9 + $0x10] sm:$0xff]
        %v642 = vld [vmem:[%s9 + $0x18] sm:$0xff]
        %644 = vset.pattern.permute.xlu0 0
        %645 = vperm.xlu0 %644, %v639
        %v646 = vpop.permute.xlu0 %645
        %649 = vset.pattern.permute.xlu0 0
        %650 = vperm.xlu0 %649, %v640
        %v651 = vpop.permute.xlu0 %650
        %654 = vset.pattern.permute.xlu0 0
        %655 = vperm.xlu0 %654, %v641
        %v656 = vpop.permute.xlu0 %655
        %659 = vset.pattern.permute.xlu0 0
        %660 = vperm.xlu0 %659, %v642
        %v661 = vpop.permute.xlu0 %660
        %vm663 = vcmask 130048
        %v665 = vsel %vm663, %v635, 0
        %v668 = vsel %vm663, %v636, 0
        %v671 = vsel %vm663, %v637, 0
        %v674 = vsel %vm663, %v638, 0
        %676 = vmatpush.msra.mxu0 0.0
        %677 = vmatpush.msra.mxu0 0.0
        %678 = vmatpush.msra.mxu0 0.0
        %679 = vmatpush.msra.mxu0 0.0
        %680 = vmatpush.msra.mxu0 0.0
        %681 = vmatpush.msra.mxu0 0.0
        %682 = vmatpush.msra.mxu0 0.0
        %683 = vmatpush.msra.mxu0 0.0
        %684 = vmatpush.msra.mxu0 0.0
        %685 = vmatpush.msra.mxu0 0.0
        %686 = vmatpush.msra.mxu0 0.0
        %687 = vmatpush.msra.mxu0 0.0
        %688 = vmatpush.msra.mxu0 0.0
        %689 = vmatpush.msra.mxu0 0.0
        %690 = vmatpush.msra.mxu0 %v527
        %691 = vmatpush.msra.mxu0 %v634
        %692 = vmatmul.f32.gmra.mxu0 %v665
        %v693 = vpop.f32.mrf.mxu0
        %v694 = vadd.f32 %v646, %v693
        %695 = vmatmul.f32.gmra.mxu0 %v668
        %v696 = vpop.f32.mrf.mxu0
        %v697 = vadd.f32 %v651, %v696
        %698 = vmatmul.f32.gmra.mxu0 %v671
        %v699 = vpop.f32.mrf.mxu0
        %v700 = vadd.f32 %v656, %v699
        %701 = vmatmul.f32.gmra.mxu0 %v674
        %v702 = vpop.f32.mrf.mxu0
        %v703 = vadd.f32 %v661, %v702
        %704 = vdwg.mxu0
        %v705 = vmax.f32 %v694, 0.0
        %v706 = vmax.f32 %v697, 0.0
        %v707 = vmax.f32 %v700, 0.0
        %v708 = vmax.f32 %v703, 0.0
        %v709 = vld [vmem:[%s10] sm:$0xff]
        %v710 = vld [vmem:[%s11] sm:$0xff]
        %712 = vset.pattern.permute.xlu0 0
        %713 = vperm.xlu0 %712, %v710
        %v714 = vpop.permute.xlu0 %713
        %vm716 = vcmask 261120
        %v718 = vsel %vm716, %v709, 0
        %720 = vmatpush.msra.mxu0 0.0
        %721 = vmatpush.msra.mxu0 0.0
        %722 = vmatpush.msra.mxu0 0.0
        %723 = vmatpush.msra.mxu0 0.0
        %724 = vmatpush.msra.mxu0 0.0
        %725 = vmatpush.msra.mxu0 0.0
        %726 = vmatpush.msra.mxu0 0.0
        %727 = vmatpush.msra.mxu0 0.0
        %728 = vmatpush.msra.mxu0 0.0
        %729 = vmatpush.msra.mxu0 0.0
        %730 = vmatpush.msra.mxu0 0.0
        %731 = vmatpush.msra.mxu0 0.0
        %732 = vmatpush.msra.mxu0 %v708
        %733 = vmatpush.msra.mxu0 %v707
        %734 = vmatpush.msra.mxu0 %v706
        %735 = vmatpush.msra.mxu0 %v705
        %736 = vmatmul.f32.gmra.mxu0 %v718
        %v737 = vpop.f32.mrf.mxu0
        %v738 = vadd.f32 %v714, %v737
        %739 = vdwg.mxu0
        %v740 = vld [vmem:[%s12] sm:$0xff]
        %742 = vset.pattern.permute.xlu0 0
        %743 = vperm.xlu0 %742, %v740
        %v744 = vpop.permute.xlu0 %743
        %v746 = vmul.f32 %v744, %v738
        %v747 = vadd.f32 %v746, %v526
        %748 = vrot.lane.b32.xlu0 %v747, 1
        %v749 = vpop.permute.xlu0 %748
        %v750 = vsel %vm530, %v749, 0.0
        %s751 = scalar_lea.vmem %s4, 24
        %v752 = vld [vmem:[%s751] sm:$0xff]
        %754 = vset.pattern.permute.xlu0 0
        %755 = vperm.xlu0 %754, %v752
        %v756 = vpop.permute.xlu0 %755
        %v758 = vmul.f32 %v756, %v750
        %v759 = vadd.f32 %v758, 0.0
        %s760 = scalar_lea.vmem %s4, 32
        %v761 = vld [vmem:[%s760] sm:$0xff]
        %763 = vset.pattern.permute.xlu0 0
        %764 = vperm.xlu0 %763, %v761
        %v765 = vpop.permute.xlu0 %764
        %v767 = vmul.f32 %v765, %v747
        %v768 = vadd.f32 %v759, %v767
        %769 = vrot.lane.b32.xlu0 %v747, 127
        %v770 = vpop.permute.xlu0 %769
        %v771 = vsel %vm531, %v770, 0.0
        %s772 = scalar_lea.vmem %s4, 40
        %v773 = vld [vmem:[%s772] sm:$0xff]
        %775 = vset.pattern.permute.xlu0 0
        %776 = vperm.xlu0 %775, %v773
        %v777 = vpop.permute.xlu0 %776
        %v779 = vmul.f32 %v777, %v771
        %v780 = vadd.f32 %v768, %v779
        %s781 = scalar_lea.vmem %s5, 8
        %v782 = vld [vmem:[%s781] sm:$0xff]
        %784 = vset.pattern.permute.xlu0 0
        %785 = vperm.xlu0 %784, %v782
        %v786 = vpop.permute.xlu0 %785
        %v788 = vadd.f32 %v780, %v786
        %s789 = scalar_lea.vmem %s463, 8 [#allocation2]
        %v790 = vld [vmem:[%s789] sm:$0xff]
        %792 = vset.pattern.permute.xlu0 0
        %793 = vperm.xlu0 %792, %v790
        %v794 = vpop.permute.xlu0 %793
        %v796 = vadd.f32 %v788, %v794
        %797 = vadd.xlane.f32.xlu0 %v796
        %v798 = vpop.xlane.xlu0 %797
        %v799 = vrot.slane %v798, 4
        %v800 = vadd.f32 %v798, %v799
        %v801 = vrot.slane %v800, 2
        %v802 = vadd.f32 %v800, %v801
        %v803 = vrot.slane %v802, 1
        %v804 = vadd.f32 %v802, %v803
        %s805 = vtos %v804
        %v806 = vstv %s805
        %v807 = vmul.f32 %v806, %v594
        %v808 = vsub.f32 %v796, %v807
        %v809 = vmul.f32 %v808, %v808
        %810 = vadd.xlane.f32.xlu0 %v809
        %v811 = vpop.xlane.xlu0 %810
        %v812 = vrot.slane %v811, 4
        %v813 = vadd.f32 %v811, %v812
        %v814 = vrot.slane %v813, 2
        %v815 = vadd.f32 %v813, %v814
        %v816 = vrot.slane %v815, 1
        %v817 = vadd.f32 %v815, %v816
        %s818 = vtos %v817
        %v819 = vstv %s818
        %v820 = vmul.f32 %v819, %v594
        %v821 = vadd.f32 %v820, 1e-05
        %v822 = vrsqrt.pop %v821
        %v823 = vmul.f32 %v822, %v821
        %v824 = vmul.f32 %v823, %v822
        %v825 = vmul.f32 0.5, %v824
        %v826 = vsub.f32 1.5, %v825
        %v827 = vmul.f32 %v822, %v826
        %vm828 = vweird.f32 %v821
        %vm829 = vweird.f32 %v822
        %vm830 = vmor %vm828, %vm829
        %v831 = vsel %vm830, %v822, %v827
        %v832 = vmul.f32 %v808, %v831
        %s833 = scalar_lea.vmem %s6, 8
        %v834 = vld [vmem:[%s833] sm:$0xff]
        %836 = vset.pattern.permute.xlu0 0
        %837 = vperm.xlu0 %836, %v834
        %v838 = vpop.permute.xlu0 %837
        %v840 = vmul.f32 %v838, %v832
        %s841 = scalar_lea.vmem %s7, 8
        %v842 = vld [vmem:[%s841] sm:$0xff]
        %844 = vset.pattern.permute.xlu0 0
        %845 = vperm.xlu0 %844, %v842
        %v846 = vpop.permute.xlu0 %845
        %v848 = vadd.f32 %v840, %v846
        %s849 = scalar_lea.vmem %s8, 32
        %v850 = vld [vmem:[%s849] sm:$0xff]
        %v851 = vld [vmem:[%s849 + $0x8] sm:$0xff]
        %v852 = vld [vmem:[%s849 + $0x10] sm:$0xff]
        %v853 = vld [vmem:[%s849 + $0x18] sm:$0xff]
        %s854 = scalar_lea.vmem %s9, 32
        %v855 = vld [vmem:[%s854] sm:$0xff]
        %v856 = vld [vmem:[%s854 + $0x8] sm:$0xff]
        %v857 = vld [vmem:[%s854 + $0x10] sm:$0xff]
        %v858 = vld [vmem:[%s854 + $0x18] sm:$0xff]
        %860 = vset.pattern.permute.xlu0 0
        %861 = vperm.xlu0 %860, %v855
        %v862 = vpop.permute.xlu0 %861
        %865 = vset.pattern.permute.xlu0 0
        %866 = vperm.xlu0 %865, %v856
        %v867 = vpop.permute.xlu0 %866
        %870 = vset.pattern.permute.xlu0 0
        %871 = vperm.xlu0 %870, %v857
        %v872 = vpop.permute.xlu0 %871
        %875 = vset.pattern.permute.xlu0 0
        %876 = vperm.xlu0 %875, %v858
        %v877 = vpop.permute.xlu0 %876
        %v880 = vsel %vm663, %v850, 0
        %v883 = vsel %vm663, %v851, 0
        %v886 = vsel %vm663, %v852, 0
        %v889 = vsel %vm663, %v853, 0
        %891 = vmatpush.msra.mxu0 0.0
        %892 = vmatpush.msra.mxu0 0.0
        %893 = vmatpush.msra.mxu0 0.0
        %894 = vmatpush.msra.mxu0 0.0
        %895 = vmatpush.msra.mxu0 0.0
        %896 = vmatpush.msra.mxu0 0.0
        %897 = vmatpush.msra.mxu0 0.0
        %898 = vmatpush.msra.mxu0 0.0
        %899 = vmatpush.msra.mxu0 0.0
        %900 = vmatpush.msra.mxu0 0.0
        %901 = vmatpush.msra.mxu0 0.0
        %902 = vmatpush.msra.mxu0 0.0
        %903 = vmatpush.msra.mxu0 0.0
        %904 = vmatpush.msra.mxu0 0.0
        %905 = vmatpush.msra.mxu0 %v527
        %906 = vmatpush.msra.mxu0 %v848
        %907 = vmatmul.f32.gmra.mxu0 %v880
        %v908 = vpop.f32.mrf.mxu0
        %v909 = vadd.f32 %v862, %v908
        %910 = vmatmul.f32.gmra.mxu0 %v883
        %v911 = vpop.f32.mrf.mxu0
        %v912 = vadd.f32 %v867, %v911
        %913 = vmatmul.f32.gmra.mxu0 %v886
        %v914 = vpop.f32.mrf.mxu0
        %v915 = vadd.f32 %v872, %v914
        %916 = vmatmul.f32.gmra.mxu0 %v889
        %v917 = vpop.f32.mrf.mxu0
        %v918 = vadd.f32 %v877, %v917
        %919 = vdwg.mxu0
        %v920 = vmax.f32 %v909, 0.0
        %v921 = vmax.f32 %v912, 0.0
        %v922 = vmax.f32 %v915, 0.0
        %v923 = vmax.f32 %v918, 0.0
        %s924 = scalar_lea.vmem %s10, 8
        %v925 = vld [vmem:[%s924] sm:$0xff]
        %s926 = scalar_lea.vmem %s11, 8
        %v927 = vld [vmem:[%s926] sm:$0xff]
        %929 = vset.pattern.permute.xlu0 0
        %930 = vperm.xlu0 %929, %v927
        %v931 = vpop.permute.xlu0 %930
        %v934 = vsel %vm716, %v925, 0
        %936 = vmatpush.msra.mxu0 0.0
        %937 = vmatpush.msra.mxu0 0.0
        %938 = vmatpush.msra.mxu0 0.0
        %939 = vmatpush.msra.mxu0 0.0
        %940 = vmatpush.msra.mxu0 0.0
        %941 = vmatpush.msra.mxu0 0.0
        %942 = vmatpush.msra.mxu0 0.0
        %943 = vmatpush.msra.mxu0 0.0
        %944 = vmatpush.msra.mxu0 0.0
        %945 = vmatpush.msra.mxu0 0.0
        %946 = vmatpush.msra.mxu0 0.0
        %947 = vmatpush.msra.mxu0 0.0
        %948 = vmatpush.msra.mxu0 %v923
        %949 = vmatpush.msra.mxu0 %v922
        %950 = vmatpush.msra.mxu0 %v921
        %951 = vmatpush.msra.mxu0 %v920
        %952 = vmatmul.f32.gmra.mxu0 %v934
        %v953 = vpop.f32.mrf.mxu0
        %v954 = vadd.f32 %v931, %v953
        %955 = vdwg.mxu0
        %s956 = scalar_lea.vmem %s12, 8
        %v957 = vld [vmem:[%s956] sm:$0xff]
        %959 = vset.pattern.permute.xlu0 0
        %960 = vperm.xlu0 %959, %v957
        %v961 = vpop.permute.xlu0 %960
        %v963 = vmul.f32 %v961, %v954
        %v964 = vadd.f32 %v963, %v747
        %v965 = vld [vmem:[%s525] sm:$0x1]
        %v967 = vperm.slane %v965, 0
        %v969 = vmul.f32 %v964, %v967
        %970 = vst [vmem:[%s514] sm:$0xff] %v969
        %s971 = sand.u32 %s328, 1
        %s972 = scalar_lea.sflag [#allocation4], %s971
        %s973 = sand.u32 %s328, 1
        %s974 = smul.addr %s973, 8
        %s975 = scalar_lea.vmem [#allocation3], %s974
        // Predicated region
        $region111: #{tpu_custom_call.1} parent=105 // pred_check
          %p976 = pneg %p338
        $region112: #{tpu_custom_call.1} parent=105 // pred_check_branch
          %978 = sbr.rel (%p976) target = $region114
        $region113: #{tpu_custom_call.1} parent=105 // pred_region
          %980 = vsyncadd %s972, 0
          %s981 = smul.addr %s27, 8
          %s982 = scalar_lea.hbm %s13, %s981
          %s984 = sshll.u32 %s975, 4
          %s985 = int_to_ptr.vmem [resolvable:$true] %s984
          %s986 = sshll.u32 %s982, 4
          %s987 = int_to_ptr.hbm [resolvable:$true] %s986
          %989 = dma.vmem_to_hbm [thread:$0]  %s985, 128, %s987, %s972
        $region114: #{tpu_custom_call.1} parent=105 // pred_fallthru
          _
      $region106: #{tpu_custom_call.1} parent=5 // pred_fallthru
        _
      %p990 = scmp.le.s32.totalorder 2, %s22
      // Predicated region
      $region115: #{tpu_custom_call.1} parent=5 // pred_check
        %p991 = pneg %p990
      $region116: #{tpu_custom_call.1} parent=5 // pred_check_branch
        %993 = sbr.rel (%p991) target = $region118
      $region117: #{tpu_custom_call.1} parent=5 // pred_region
        %s994 = ssub.s32 %s22, 2
        // Predicated region
        $region119: #{tpu_custom_call.1} parent=117 // pred_check
          %p995 = pneg %p344
        $region120: #{tpu_custom_call.1} parent=117 // pred_check_branch
          %997 = sbr.rel (%p995) target = $region122
        $region121: #{tpu_custom_call.1} parent=117 // pred_region
          %s998 = sand.u32 %s329, 1
          %s999 = scalar_lea.sflag [#allocation4], %s998
          %s1000 = sand.u32 %s329, 1
          %s1001 = smul.addr %s1000, 8
          %s1002 = scalar_lea.vmem [#allocation3], %s1001
          %1004 = dma.done %s999, 128
        $region122: #{tpu_custom_call.1} parent=117 // pred_fallthru
          _
      $region118: #{tpu_custom_call.1} parent=5 // pred_fallthru
        _
    $region6: #{tpu_custom_call.1} parent=1 // loop_footer
      %s26 = sadd.s32 1, %s22
    $region7: #{tpu_custom_call.1} parent=1 // loop_footer_branch
      %21 = sbr.rel target = $region3
    $region8: #{tpu_custom_call.1} parent=1 // loop_exit
      _
    %1005 = vsyncpa [#allocation4], 1
    %s1006 = scalar_lea.sflag [#allocation4], 1
    %1007 = vsyncpa %s1006, 1

</llo_original>
